<compile_context>
chip_gen: v7x
topology: tpu7x:2x2x1
jax: 0.10.0
libtpu: 0.0.40
codegen_flags: <defaults>
</compile_context>

<pallas_src>
import math

import jax
import jax.numpy as jnp
from jax.experimental import pallas as pl
from jax.experimental.pallas import tpu as pltpu


def _round_up(v, m):
    return ((v + m - 1) // m) * m


def diplomacy_block_kernel(x_ref, w_ref, shift_ref, o_ref):
    # x_ref:     (TM, N*Fin)     bf16; rows = flattened (batch*step), lane-dense features
    # w_ref:     (N*Fin, N*Fout) bf16; fused  A . W . BN-scale  weight
    # shift_ref: (1, N*Fout)     f32;  folded (GraphConv bias + BN) shift, lane-aligned
    # o_ref:     (TM, N*Fout)    f32
    x = x_ref[...]

    # Fused GraphConv (per-node linear + graph mixing) + BN scale: one MXU matmul.
    h = jnp.dot(x, w_ref[...], preferred_element_type=jnp.float32)

    # Folded bias/BN shift, ReLU, dropout (eval -> identity), residual connection.
    h = jnp.maximum(h + shift_ref[...], 0.0) + x.astype(jnp.float32)

    o_ref[...] = h.astype(o_ref.dtype)


def _pallas_forward(x_bf, W_eff, shift, TM, NFin, NFout, single_buffer_consts):
    Mp = x_bf.shape[0]
    if single_buffer_consts:
        # Grid-invariant operands: no double-buffering needed.
        w_spec = pl.BlockSpec((NFin, NFout), lambda i: (0, 0),
                              pipeline_mode=pl.Buffered(1))
        s_spec = pl.BlockSpec((1, NFout), lambda i: (0, 0),
                              pipeline_mode=pl.Buffered(1))
    else:
        w_spec = pl.BlockSpec((NFin, NFout), lambda i: (0, 0))
        s_spec = pl.BlockSpec((1, NFout), lambda i: (0, 0))

    return pl.pallas_call(
        diplomacy_block_kernel,
        out_shape=jax.ShapeDtypeStruct((Mp, NFout), jnp.float32),
        grid_spec=pltpu.PrefetchScalarGridSpec(
            num_scalar_prefetch=0,
            grid=(Mp // TM,),
            in_specs=[
                pl.BlockSpec((TM, NFin), lambda i: (i, 0)),
                w_spec,
                s_spec,
            ],
            out_specs=pl.BlockSpec((TM, NFout), lambda i: (i, 0)),
        ),
        compiler_params=pltpu.CompilerParams(
            dimension_semantics=("parallel",),
            vmem_limit_bytes=32 * 1024 * 1024),
    )(x_bf, W_eff, shift)


def make_diplomacy_block(W, A, b, gamma, beta, running_mean, running_var, eps=1e-5):
    """One-time parameter prep (eval mode, learnable_A=False). Returns forward(x)."""
    N, Fin, Fout = W.shape
    assert Fin == Fout, "residual connection requires in_size == out_size"
    NFin, NFout = N * Fin, N * Fout
    f32 = jnp.float32

    inv_std = 1.0 / jnp.sqrt(running_var.astype(f32) + eps)
    scale_n = gamma.astype(f32) * inv_std                              # (N,) per-node BN scale
    bias = b.reshape(Fout).astype(f32)                                 # (Fout,)

    # Fused weight:  out[r, m*F+o] = sum_{n,f} A[m,n] * W[n,f,o] * scale[m] * x[r, n*F+f]
    W_eff = jnp.einsum("mn,nfo,m->nfmo", A.astype(f32), W.astype(f32),
                       scale_n).reshape(NFin, NFout)
    # Folded shift:  BN(y + bias) = y*scale[m] + ((bias[o] - mean[m])*scale[m] + beta[m])
    shift = ((bias[None, :] - running_mean.astype(f32)[:, None]) * scale_n[:, None]
             + beta.astype(f32)[:, None]).reshape(1, NFout)

    W_eff = jax.device_put(W_eff.astype(jnp.bfloat16))
    shift = jax.device_put(shift)

    def forward(x):
        B, S, Nx, Fx = x.shape
        assert (Nx, Fx) == (N, Fin)
        M = B * S

        # Collapse (B, S) into the matmul M dimension; features stay lane-dense.
        x_flat = x.reshape(M, NFin)

        # Row tile: multiple of 8 sublanes, >= 2 grid steps whenever M allows
        # (keeps both v7x TensorCores busy), capped at 512 rows.
        TM = max(8, min(512, _round_up(pl.cdiv(M, 2), 8)))
        Mp = _round_up(M, TM)
        if Mp != M:
            x_flat = jnp.pad(x_flat, ((0, Mp - M), (0, 0)))
        x_bf = x_flat.astype(jnp.bfloat16)

        # pipeline_mode=pl.Buffered(1) with graceful fallback (errors surface at
        # trace/lower time in eager mode, so the except path is safe).
        try:
            out = _pallas_forward(x_bf, W_eff, shift, TM, NFin, NFout, True)
        except Exception:
            out = _pallas_forward(x_bf, W_eff, shift, TM, NFin, NFout, False)

        return out[:M].reshape(B, S, N, Fout).astype(x.dtype)

    return forward


def reference(x, W, A, b, gamma, beta, running_mean, running_var, eps=1e-5):
    """Pure-JAX f32 reimplementation of the PyTorch forward (eval mode)."""
    Bsz, S, N, Fin = x.shape
    rm = running_mean[None, :, None]
    rv = running_var[None, :, None]
    g = gamma[None, :, None]
    bt = beta[None, :, None]
    outs = []
    for s in range(S):
        xs = x[:, s]                                   # (B, N, Fin)
        h = jnp.einsum("bnf,nfo->bno", xs, W)          # x @ W (per node)
        h = jnp.einsum("mn,bno->bmo", A, h)            # A @ x
        h = h + b                                      # + b
        h = (h - rm) / jnp.sqrt(rv + eps) * g + bt     # BatchNorm1d (eval)
        h = jnp.maximum(h, 0.0)                        # ReLU (dropout = identity)
        h = h + xs                                     # residual
        outs.append(h)
    return jnp.stack(outs, axis=1)


if __name__ == "__main__":
    key = jax.random.PRNGKey(0)
    kx, kw, ka, kb, kg, kb2, krm, krv = jax.random.split(key, 8)

    B, S, N, F = 2, 4, 16, 32   # batch, num_step, num_loc, in_size == out_size

    # inputs
    x = jax.random.normal(kx, (B, S, N, F), dtype=jnp.float32)

    # GraphConv parameters (mirrors the module __init__; nonzero bias to test the fold)
    W = jax.random.normal(kw, (N, F, F), dtype=jnp.float32) * math.sqrt(2.0 / F)  # he_init
    A_raw = (jax.random.uniform(ka, (N, N)) < 0.3).astype(jnp.float32) + jnp.eye(N)
    A = A_raw / jnp.sum(A_raw, axis=1, keepdims=True)   # deterministic adjacency
    b = 0.05 * jax.random.normal(kb, (1, 1, F), dtype=jnp.float32)

    # BatchNorm1d(N) parameters / running stats (deterministic, non-trivial)
    gamma = 1.0 + 0.1 * jax.random.normal(kg, (N,), dtype=jnp.float32)
    beta = 0.1 * jax.random.normal(kb2, (N,), dtype=jnp.float32)
    running_mean = 0.1 * jax.random.normal(krm, (N,), dtype=jnp.float32)
    running_var = 0.5 + jnp.abs(jax.random.normal(krv, (N,), dtype=jnp.float32))

    # Parameter prep hoisted out of the per-forward hot path (eval-mode block).
    block = make_diplomacy_block(x=None if False else W, A=A, b=b, gamma=gamma,
                                 beta=beta, running_mean=running_mean,
                                 running_var=running_var) if False else \
            make_diplomacy_block(W, A, b, gamma, beta, running_mean, running_var)

    out = block(x)
    out = jax.block_until_ready(out)

    ref = reference(x, W, A, b, gamma, beta, running_mean, running_var)
    assert out.shape == (B, S, N, F), out.shape
    # bf16 MXU operands (f32 accumulation) + bf16 residual cast -> relaxed tolerance.
    assert jnp.allclose(out, ref, rtol=2e-2, atol=3e-2), (
        float(jnp.max(jnp.abs(out - ref))))

    print("KERNEL_OK")
</pallas_src>

<mosaic_0001>
module attributes {stable_mosaic.version = 11 : i64} {
  func.func @diplomacy_block_kernel(%arg0: i32, %arg1: memref<8x512xbf16, #tpu.memory_space<vmem>>, %arg2: memref<512x512xbf16, #tpu.memory_space<vmem>>, %arg3: memref<1x512xf32, #tpu.memory_space<vmem>>, %arg4: memref<8x512xf32, #tpu.memory_space<vmem>>) attributes {dimension_semantics = [#tpu.dimension_semantics<parallel>], iteration_bounds = array<i64: 1>, scalar_prefetch = 0 : i64, scratch_operands = 0 : i64, tpu.core_type = #tpu.core_type<tc>, window_params = [{transform_indices = @transform_0, window_bounds = array<i64: 8, 512>}, {pipeline_mode = #tpu.pipeline_mode<synchronous>, transform_indices = @transform_1, window_bounds = array<i64: 512, 512>}, {pipeline_mode = #tpu.pipeline_mode<synchronous>, transform_indices = @transform_2, window_bounds = array<i64: 1, 512>}, {transform_indices = @transform_3, window_bounds = array<i64: 8, 512>}]} {
    %c0 = arith.constant 0 : index
    %c0_0 = arith.constant 0 : index
    %0 = vector.load %arg1[%c0, %c0_0] : memref<8x512xbf16, #tpu.memory_space<vmem>>, vector<8x512xbf16>
    %c0_1 = arith.constant 0 : index
    %c0_2 = arith.constant 0 : index
    %1 = vector.load %arg2[%c0_1, %c0_2] : memref<512x512xbf16, #tpu.memory_space<vmem>>, vector<512x512xbf16>
    %cst = arith.constant dense<0.000000e+00> : vector<8x512xf32>
    %2 = tpu.matmul %0, %1, %cst {dimension_numbers = #tpu.dot_dimension_numbers<[1], [0], [0], [1], [0, 0, 1, 1], [], []>} : vector<8x512xbf16>, vector<512x512xbf16>, vector<8x512xf32> -> vector<8x512xf32>
    %c0_3 = arith.constant 0 : index
    %c0_4 = arith.constant 0 : index
    %3 = vector.load %arg3[%c0_3, %c0_4] : memref<1x512xf32, #tpu.memory_space<vmem>>, vector<1x512xf32>
    %4 = vector.broadcast %3 : vector<1x512xf32> to vector<8x512xf32>
    %5 = arith.addf %2, %4 : vector<8x512xf32>
    %cst_5 = arith.constant 0.000000e+00 : f32
    %6 = vector.broadcast %cst_5 : f32 to vector<8x512xf32>
    %7 = arith.maximumf %5, %6 : vector<8x512xf32>
    %8 = arith.extf %0 : vector<8x512xbf16> to vector<8x512xf32>
    %9 = arith.addf %7, %8 : vector<8x512xf32>
    %c0_6 = arith.constant 0 : index
    %c0_7 = arith.constant 0 : index
    %10 = vector.load %arg4[%c0_6, %c0_7] : memref<8x512xf32, #tpu.memory_space<vmem>>, vector<8x512xf32>
    tpu.vector_store %arg4[%c0_6, %c0_7], %9 {strides = array<i32>} : memref<8x512xf32, #tpu.memory_space<vmem>>, vector<8x512xf32>,
    return
  }
  func.func @transform_0(%arg0: i32) -> (i32, i32) {
    %c0_i32 = arith.constant 0 : i32
    %c0_i32_0 = arith.constant 0 : i32
    return %arg0, %c0_i32 : i32, i32
  }
  func.func @transform_1(%arg0: i32) -> (i32, i32) {
    %c0_i32 = arith.constant 0 : i32
    %c0_i32_0 = arith.constant 0 : i32
    %c0_i32_1 = arith.constant 0 : i32
    return %c0_i32, %c0_i32_0 : i32, i32
  }
  func.func @transform_2(%arg0: i32) -> (i32, i32) {
    %c0_i32 = arith.constant 0 : i32
    %c0_i32_0 = arith.constant 0 : i32
    %c0_i32_1 = arith.constant 0 : i32
    return %c0_i32, %c0_i32_0 : i32, i32
  }
  func.func @transform_3(%arg0: i32) -> (i32, i32) {
    %c0_i32 = arith.constant 0 : i32
    %c0_i32_0 = arith.constant 0 : i32
    return %arg0, %c0_i32 : i32, i32
  }
}

module attributes {stable_mosaic.version = 11 : i64} {
  func.func @diplomacy_block_kernel(%arg0: i32, %arg1: memref<8x512xbf16, #tpu.memory_space<vmem>>, %arg2: memref<512x512xbf16, #tpu.memory_space<vmem>>, %arg3: memref<1x512xf32, #tpu.memory_space<vmem>>, %arg4: memref<8x512xf32, #tpu.memory_space<vmem>>) attributes {dimension_semantics = [#tpu.dimension_semantics<parallel>], iteration_bounds = array<i64: 1>, scalar_prefetch = 0 : i64, scratch_operands = 0 : i64, tpu.core_type = #tpu.core_type<tc>, window_params = [{transform_indices = @transform_0, window_bounds = array<i64: 8, 512>}, {pipeline_mode = #tpu.pipeline_mode<synchronous>, transform_indices = @transform_1, window_bounds = array<i64: 512, 512>}, {pipeline_mode = #tpu.pipeline_mode<synchronous>, transform_indices = @transform_2, window_bounds = array<i64: 1, 512>}, {transform_indices = @transform_3, window_bounds = array<i64: 8, 512>}]} {
    %c0 = arith.constant 0 : index
    %c0_0 = arith.constant 0 : index
    %0 = vector.load %arg1[%c0, %c0_0] : memref<8x512xbf16, #tpu.memory_space<vmem>>, vector<8x512xbf16>
    %c0_1 = arith.constant 0 : index
    %c0_2 = arith.constant 0 : index
    %1 = vector.load %arg2[%c0_1, %c0_2] : memref<512x512xbf16, #tpu.memory_space<vmem>>, vector<512x512xbf16>
    %cst = arith.constant dense<0.000000e+00> : vector<8x512xf32>
    %2 = tpu.matmul %0, %1, %cst {dimension_numbers = #tpu.dot_dimension_numbers<[1], [0], [0], [1], [0, 0, 1, 1], [], []>} : vector<8x512xbf16>, vector<512x512xbf16>, vector<8x512xf32> -> vector<8x512xf32>
    %c0_3 = arith.constant 0 : index
    %c0_4 = arith.constant 0 : index
    %3 = vector.load %arg3[%c0_3, %c0_4] : memref<1x512xf32, #tpu.memory_space<vmem>>, vector<1x512xf32>
    %4 = vector.broadcast %3 : vector<1x512xf32> to vector<8x512xf32>
    %5 = arith.addf %2, %4 : vector<8x512xf32>
    %cst_5 = arith.constant 0.000000e+00 : f32
    %6 = vector.broadcast %cst_5 : f32 to vector<8x512xf32>
    %7 = arith.maximumf %5, %6 : vector<8x512xf32>
    %8 = arith.extf %0 : vector<8x512xbf16> to vector<8x512xf32>
    %9 = arith.addf %7, %8 : vector<8x512xf32>
    %c0_6 = arith.constant 0 : index
    %c0_7 = arith.constant 0 : index
    %10 = vector.load %arg4[%c0_6, %c0_7] : memref<8x512xf32, #tpu.memory_space<vmem>>, vector<8x512xf32>
    tpu.vector_store %arg4[%c0_6, %c0_7], %9 {strides = array<i32>} : memref<8x512xf32, #tpu.memory_space<vmem>>, vector<8x512xf32>,
    return
  }
  func.func @transform_0(%arg0: i32) -> (i32, i32) {
    %c0_i32 = arith.constant 0 : i32
    %c0_i32_0 = arith.constant 0 : i32
    return %arg0, %c0_i32 : i32, i32
  }
  func.func @transform_1(%arg0: i32) -> (i32, i32) {
    %c0_i32 = arith.constant 0 : i32
    %c0_i32_0 = arith.constant 0 : i32
    %c0_i32_1 = arith.constant 0 : i32
    return %c0_i32, %c0_i32_0 : i32, i32
  }
  func.func @transform_2(%arg0: i32) -> (i32, i32) {
    %c0_i32 = arith.constant 0 : i32
    %c0_i32_0 = arith.constant 0 : i32
    %c0_i32_1 = arith.constant 0 : i32
    return %c0_i32, %c0_i32_0 : i32, i32
  }
  func.func @transform_3(%arg0: i32) -> (i32, i32) {
    %c0_i32 = arith.constant 0 : i32
    %c0_i32_0 = arith.constant 0 : i32
    return %arg0, %c0_i32 : i32, i32
  }
}

</mosaic_0001>

<llo_original>
// kernel: tpu_custom_call.1
$region0: #{tpu_custom_call.1}
  #allocation0 [shape = 'u32[]', space=smem, size = 0x4, offset = 0x4, fixed_abs, tag = 'smem constant byte address 0x4 - core index']
  #allocation1 [shape = 'u32[144,128]{1,0:T(1,128)}', space=vmem, size = 0x12000, scoped, tag = 'internal scratch']
  %s0 = inlined_call_operand.hbm [shape: bf16[8,512], index: 0, kind: input, shape index: {}]
  %s1 = inlined_call_operand.hbm [shape: bf16[512,512], index: 1, kind: input, shape index: {}]
  %s2 = inlined_call_operand.vmem [shape: f32[1,512], index: 2, kind: input, shape index: {}]
  %s3 = inlined_call_operand.hbm [shape: f32[8,512], index: 3, kind: output, shape index: {}]
  %s4 = sld [smem:[#allocation0]]
  $region30: #{tpu_custom_call.1} parent=0
    _
  %s6 = ssub.s32 1, %s4
  %s7 = scalar_select 0, %s6, %s4
  $region1: #{tpu_custom_call.1} parent=0
    #allocation2 [shape = 'u8[8192]{0}', space=vmem, size = 0x2000, scoped, tag = 'input window, operand 0, single buffered']
    #allocation3 [shape = 's32[1]{0}', space=sflag, size = 0x4, scoped, tag = 'scoped memory for tpu_custom_call.1']
    #allocation4 [shape = 's32[1]{0}', space=sflag, size = 0x4, scoped, tag = 'scoped memory for tpu_custom_call.1']
    #allocation5 [shape = 'u8[524288]{0}', space=vmem, size = 0x80000, scoped, tag = 'input window, operand 1, single buffered']
    #allocation6 [shape = 's32[1]{0}', space=sflag, size = 0x4, scoped, tag = 'scoped memory for tpu_custom_call.1']
    #allocation7 [shape = 'u8[16384]{0}', space=vmem, size = 0x4000, scoped, tag = 'output window, operand 0, single buffered']
    %8 = vsyncpa [#allocation3], 0
    %9 = vsyncpa [#allocation6], 0
    %10 = vsyncpa [#allocation4], 0
    // Predicated region
    $region2: #{tpu_custom_call.1} parent=1 // pred_check
      _
    $region3: #{tpu_custom_call.1} parent=1 // pred_check_branch
      %12 = sbr.rel (0) target = $region5
    $region4: #{tpu_custom_call.1} parent=1 // pred_region
      %s14 = ssub.s32 256, 256
      %15 = vsyncadd [#allocation3], %s14
      %s17 = sshll.u32 [#allocation2], 4
      %s18 = int_to_ptr.vmem [resolvable:$true] %s17
      %20 = dma.hbm_to_vmem [thread:$0]  %s0, 256, %s18, [#allocation3]
    $region5: #{tpu_custom_call.1} parent=1 // pred_fallthru
      _
    // Predicated region
    $region6: #{tpu_custom_call.1} parent=1 // pred_check
      _
    $region7: #{tpu_custom_call.1} parent=1 // pred_check_branch
      %22 = sbr.rel (0) target = $region9
    $region8: #{tpu_custom_call.1} parent=1 // pred_region
      %s24 = ssub.s32 16384, 16384
      %25 = vsyncadd [#allocation6], %s24
      %s26 = sshll.u32 [#allocation5], 4
      %s27 = int_to_ptr.vmem [resolvable:$true] %s26
      %32 = dma.hbm_to_vmem [thread:$0]  %s1, 16384, %s27, [#allocation6], 256, 256, 16
    $region9: #{tpu_custom_call.1} parent=1 // pred_fallthru
      _
    // Predicated region
    $region10: #{tpu_custom_call.1} parent=1 // pred_check
      _
    $region11: #{tpu_custom_call.1} parent=1 // pred_check_branch
      %34 = sbr.rel (0) target = $region13
    $region12: #{tpu_custom_call.1} parent=1 // pred_region
      _
    $region13: #{tpu_custom_call.1} parent=1 // pred_fallthru
      _
    // Predicated region
    $region14: #{tpu_custom_call.1} parent=1 // pred_check
      _
    $region15: #{tpu_custom_call.1} parent=1 // pred_check_branch
      %36 = sbr.rel (0) target = $region17
    $region16: #{tpu_custom_call.1} parent=1 // pred_region
      %37 = dma.done [#allocation3], 256
    $region17: #{tpu_custom_call.1} parent=1 // pred_fallthru
      _
    // Predicated region
    $region18: #{tpu_custom_call.1} parent=1 // pred_check
      _
    $region19: #{tpu_custom_call.1} parent=1 // pred_check_branch
      %39 = sbr.rel (0) target = $region21
    $region20: #{tpu_custom_call.1} parent=1 // pred_region
      %40 = dma.done [#allocation6], 16384
    $region21: #{tpu_custom_call.1} parent=1 // pred_fallthru
      _
    %v41 = vld [vmem:[#allocation2] sm:$0xff]
    %v42 = vld [vmem:[#allocation2 + $0x8] sm:$0xff]
    %v43 = vld [vmem:[#allocation5] sm:$0xff]
    %v44 = vld [vmem:[#allocation5 + $0x8] sm:$0xff]
    %v45 = vld [vmem:[#allocation5 + $0x10] sm:$0xff]
    %v46 = vld [vmem:[#allocation5 + $0x18] sm:$0xff]
    %v47 = vld [vmem:[#allocation5 + $0x20] sm:$0xff]
    %v48 = vld [vmem:[#allocation5 + $0x28] sm:$0xff]
    %v49 = vld [vmem:[#allocation5 + $0x30] sm:$0xff]
    %v50 = vld [vmem:[#allocation5 + $0x38] sm:$0xff]
    %v51 = vld [vmem:[#allocation5 + $0x40] sm:$0xff]
    %v52 = vld [vmem:[#allocation5 + $0x48] sm:$0xff]
    %v53 = vld [vmem:[#allocation5 + $0x50] sm:$0xff]
    %v54 = vld [vmem:[#allocation5 + $0x58] sm:$0xff]
    %v55 = vld [vmem:[#allocation5 + $0x60] sm:$0xff]
    %v56 = vld [vmem:[#allocation5 + $0x68] sm:$0xff]
    %v57 = vld [vmem:[#allocation5 + $0x70] sm:$0xff]
    %v58 = vld [vmem:[#allocation5 + $0x78] sm:$0xff]
    %v59 = vld [vmem:[#allocation5 + $0x80] sm:$0xff]
    %v60 = vld [vmem:[#allocation5 + $0x88] sm:$0xff]
    %v61 = vld [vmem:[#allocation5 + $0x90] sm:$0xff]
    %v62 = vld [vmem:[#allocation5 + $0x98] sm:$0xff]
    %v63 = vld [vmem:[#allocation5 + $0xa0] sm:$0xff]
    %v64 = vld [vmem:[#allocation5 + $0xa8] sm:$0xff]
    %v65 = vld [vmem:[#allocation5 + $0xb0] sm:$0xff]
    %v66 = vld [vmem:[#allocation5 + $0xb8] sm:$0xff]
    %v67 = vld [vmem:[#allocation5 + $0xc0] sm:$0xff]
    %v68 = vld [vmem:[#allocation5 + $0xc8] sm:$0xff]
    %v69 = vld [vmem:[#allocation5 + $0xd0] sm:$0xff]
    %v70 = vld [vmem:[#allocation5 + $0xd8] sm:$0xff]
    %v71 = vld [vmem:[#allocation5 + $0xe0] sm:$0xff]
    %v72 = vld [vmem:[#allocation5 + $0xe8] sm:$0xff]
    %v73 = vld [vmem:[#allocation5 + $0xf0] sm:$0xff]
    %v74 = vld [vmem:[#allocation5 + $0xf8] sm:$0xff]
    %v75 = vld [vmem:[#allocation5 + $0x100] sm:$0xff]
    %v76 = vld [vmem:[#allocation5 + $0x108] sm:$0xff]
    %v77 = vld [vmem:[#allocation5 + $0x110] sm:$0xff]
    %v78 = vld [vmem:[#allocation5 + $0x118] sm:$0xff]
    %v79 = vld [vmem:[#allocation5 + $0x120] sm:$0xff]
    %v80 = vld [vmem:[#allocation5 + $0x128] sm:$0xff]
    %v81 = vld [vmem:[#allocation5 + $0x130] sm:$0xff]
    %v82 = vld [vmem:[#allocation5 + $0x138] sm:$0xff]
    %v83 = vld [vmem:[#allocation5 + $0x140] sm:$0xff]
    %v84 = vld [vmem:[#allocation5 + $0x148] sm:$0xff]
    %v85 = vld [vmem:[#allocation5 + $0x150] sm:$0xff]
    %v86 = vld [vmem:[#allocation5 + $0x158] sm:$0xff]
    %v87 = vld [vmem:[#allocation5 + $0x160] sm:$0xff]
    %v88 = vld [vmem:[#allocation5 + $0x168] sm:$0xff]
    %v89 = vld [vmem:[#allocation5 + $0x170] sm:$0xff]
    %v90 = vld [vmem:[#allocation5 + $0x178] sm:$0xff]
    %v91 = vld [vmem:[#allocation5 + $0x180] sm:$0xff]
    %v92 = vld [vmem:[#allocation5 + $0x188] sm:$0xff]
    %v93 = vld [vmem:[#allocation5 + $0x190] sm:$0xff]
    %v94 = vld [vmem:[#allocation5 + $0x198] sm:$0xff]
    %v95 = vld [vmem:[#allocation5 + $0x1a0] sm:$0xff]
    %v96 = vld [vmem:[#allocation5 + $0x1a8] sm:$0xff]
    %v97 = vld [vmem:[#allocation5 + $0x1b0] sm:$0xff]
    %v98 = vld [vmem:[#allocation5 + $0x1b8] sm:$0xff]
    %v99 = vld [vmem:[#allocation5 + $0x1c0] sm:$0xff]
    %v100 = vld [vmem:[#allocation5 + $0x1c8] sm:$0xff]
    %v101 = vld [vmem:[#allocation5 + $0x1d0] sm:$0xff]
    %v102 = vld [vmem:[#allocation5 + $0x1d8] sm:$0xff]
    %v103 = vld [vmem:[#allocation5 + $0x1e0] sm:$0xff]
    %v104 = vld [vmem:[#allocation5 + $0x1e8] sm:$0xff]
    %v105 = vld [vmem:[#allocation5 + $0x1f0] sm:$0xff]
    %v106 = vld [vmem:[#allocation5 + $0x1f8] sm:$0xff]
    %v107 = vld [vmem:[#allocation5 + $0x200] sm:$0xff]
    %v108 = vld [vmem:[#allocation5 + $0x208] sm:$0xff]
    %v109 = vld [vmem:[#allocation5 + $0x210] sm:$0xff]
    %v110 = vld [vmem:[#allocation5 + $0x218] sm:$0xff]
    %v111 = vld [vmem:[#allocation5 + $0x220] sm:$0xff]
    %v112 = vld [vmem:[#allocation5 + $0x228] sm:$0xff]
    %v113 = vld [vmem:[#allocation5 + $0x230] sm:$0xff]
    %v114 = vld [vmem:[#allocation5 + $0x238] sm:$0xff]
    %v115 = vld [vmem:[#allocation5 + $0x240] sm:$0xff]
    %v116 = vld [vmem:[#allocation5 + $0x248] sm:$0xff]
    %v117 = vld [vmem:[#allocation5 + $0x250] sm:$0xff]
    %v118 = vld [vmem:[#allocation5 + $0x258] sm:$0xff]
    %v119 = vld [vmem:[#allocation5 + $0x260] sm:$0xff]
    %v120 = vld [vmem:[#allocation5 + $0x268] sm:$0xff]
    %v121 = vld [vmem:[#allocation5 + $0x270] sm:$0xff]
    %v122 = vld [vmem:[#allocation5 + $0x278] sm:$0xff]
    %v123 = vld [vmem:[#allocation5 + $0x280] sm:$0xff]
    %v124 = vld [vmem:[#allocation5 + $0x288] sm:$0xff]
    %v125 = vld [vmem:[#allocation5 + $0x290] sm:$0xff]
    %v126 = vld [vmem:[#allocation5 + $0x298] sm:$0xff]
    %v127 = vld [vmem:[#allocation5 + $0x2a0] sm:$0xff]
    %v128 = vld [vmem:[#allocation5 + $0x2a8] sm:$0xff]
    %v129 = vld [vmem:[#allocation5 + $0x2b0] sm:$0xff]
    %v130 = vld [vmem:[#allocation5 + $0x2b8] sm:$0xff]
    %v131 = vld [vmem:[#allocation5 + $0x2c0] sm:$0xff]
    %v132 = vld [vmem:[#allocation5 + $0x2c8] sm:$0xff]
    %v133 = vld [vmem:[#allocation5 + $0x2d0] sm:$0xff]
    %v134 = vld [vmem:[#allocation5 + $0x2d8] sm:$0xff]
    %v135 = vld [vmem:[#allocation5 + $0x2e0] sm:$0xff]
    %v136 = vld [vmem:[#allocation5 + $0x2e8] sm:$0xff]
    %v137 = vld [vmem:[#allocation5 + $0x2f0] sm:$0xff]
    %v138 = vld [vmem:[#allocation5 + $0x2f8] sm:$0xff]
    %v139 = vld [vmem:[#allocation5 + $0x300] sm:$0xff]
    %v140 = vld [vmem:[#allocation5 + $0x308] sm:$0xff]
    %v141 = vld [vmem:[#allocation5 + $0x310] sm:$0xff]
    %v142 = vld [vmem:[#allocation5 + $0x318] sm:$0xff]
    %v143 = vld [vmem:[#allocation5 + $0x320] sm:$0xff]
    %v144 = vld [vmem:[#allocation5 + $0x328] sm:$0xff]
    %v145 = vld [vmem:[#allocation5 + $0x330] sm:$0xff]
    %v146 = vld [vmem:[#allocation5 + $0x338] sm:$0xff]
    %v147 = vld [vmem:[#allocation5 + $0x340] sm:$0xff]
    %v148 = vld [vmem:[#allocation5 + $0x348] sm:$0xff]
    %v149 = vld [vmem:[#allocation5 + $0x350] sm:$0xff]
    %v150 = vld [vmem:[#allocation5 + $0x358] sm:$0xff]
    %v151 = vld [vmem:[#allocation5 + $0x360] sm:$0xff]
    %v152 = vld [vmem:[#allocation5 + $0x368] sm:$0xff]
    %v153 = vld [vmem:[#allocation5 + $0x370] sm:$0xff]
    %v154 = vld [vmem:[#allocation5 + $0x378] sm:$0xff]
    %v155 = vld [vmem:[#allocation5 + $0x380] sm:$0xff]
    %v156 = vld [vmem:[#allocation5 + $0x388] sm:$0xff]
    %v157 = vld [vmem:[#allocation5 + $0x390] sm:$0xff]
    %v158 = vld [vmem:[#allocation5 + $0x398] sm:$0xff]
    %v159 = vld [vmem:[#allocation5 + $0x3a0] sm:$0xff]
    %v160 = vld [vmem:[#allocation5 + $0x3a8] sm:$0xff]
    %v161 = vld [vmem:[#allocation5 + $0x3b0] sm:$0xff]
    %v162 = vld [vmem:[#allocation5 + $0x3b8] sm:$0xff]
    %v163 = vld [vmem:[#allocation5 + $0x3c0] sm:$0xff]
    %v164 = vld [vmem:[#allocation5 + $0x3c8] sm:$0xff]
    %v165 = vld [vmem:[#allocation5 + $0x3d0] sm:$0xff]
    %v166 = vld [vmem:[#allocation5 + $0x3d8] sm:$0xff]
    %v167 = vld [vmem:[#allocation5 + $0x3e0] sm:$0xff]
    %v168 = vld [vmem:[#allocation5 + $0x3e8] sm:$0xff]
    %v169 = vld [vmem:[#allocation5 + $0x3f0] sm:$0xff]
    %v170 = vld [vmem:[#allocation5 + $0x3f8] sm:$0xff]
    %v171 = vld [vmem:[%s2] sm:$0xf]
    %v173 = vlaneseq
    %v174 = vshrl.u32 %v173, 7
    %v175 = vsub.s32 0, %v174
    %v176 = vrot.slane %v171, %v175
    %v177 = vlaneseq
    %v178 = vshrl.u32 %v177, 7
    %v179 = vsub.s32 1, %v178
    %v180 = vrot.slane %v171, %v179
    %v181 = vlaneseq
    %v182 = vshrl.u32 %v181, 7
    %v183 = vsub.s32 2, %v182
    %v184 = vrot.slane %v171, %v183
    %v185 = vlaneseq
    %v186 = vshrl.u32 %v185, 7
    %v187 = vsub.s32 3, %v186
    %v188 = vrot.slane %v171, %v187
    %v195 = vunpack.c.l.b16 %v41
    %v196 = vunpack.c.h.b16 %v41
    %v197 = vunpack.c.l.b16 %v42
    %v198 = vunpack.c.h.b16 %v42
    %v199 = vpack.c.b16 %v195, %v195
    %v200 = vpack.c.b16 %v196, %v196
    %v201 = vpack.c.b16 %v197, %v197
    %v202 = vpack.c.b16 %v198, %v198
    %v335 = vunpack.c.l.b16 %v43
    %v336 = vunpack.c.h.b16 %v43
    %v337 = vunpack.c.l.b16 %v44
    %v338 = vunpack.c.h.b16 %v44
    %v339 = vunpack.c.l.b16 %v45
    %v340 = vunpack.c.h.b16 %v45
    %v341 = vunpack.c.l.b16 %v46
    %v342 = vunpack.c.h.b16 %v46
    %v343 = vunpack.c.l.b16 %v47
    %v344 = vunpack.c.h.b16 %v47
    %v345 = vunpack.c.l.b16 %v48
    %v346 = vunpack.c.h.b16 %v48
    %v347 = vunpack.c.l.b16 %v49
    %v348 = vunpack.c.h.b16 %v49
    %v349 = vunpack.c.l.b16 %v50
    %v350 = vunpack.c.h.b16 %v50
    %v351 = vunpack.c.l.b16 %v51
    %v352 = vunpack.c.h.b16 %v51
    %v353 = vunpack.c.l.b16 %v52
    %v354 = vunpack.c.h.b16 %v52
    %v355 = vunpack.c.l.b16 %v53
    %v356 = vunpack.c.h.b16 %v53
    %v357 = vunpack.c.l.b16 %v54
    %v358 = vunpack.c.h.b16 %v54
    %v359 = vunpack.c.l.b16 %v55
    %v360 = vunpack.c.h.b16 %v55
    %v361 = vunpack.c.l.b16 %v56
    %v362 = vunpack.c.h.b16 %v56
    %v363 = vunpack.c.l.b16 %v57
    %v364 = vunpack.c.h.b16 %v57
    %v365 = vunpack.c.l.b16 %v58
    %v366 = vunpack.c.h.b16 %v58
    %v367 = vunpack.c.l.b16 %v59
    %v368 = vunpack.c.h.b16 %v59
    %v369 = vunpack.c.l.b16 %v60
    %v370 = vunpack.c.h.b16 %v60
    %v371 = vunpack.c.l.b16 %v61
    %v372 = vunpack.c.h.b16 %v61
    %v373 = vunpack.c.l.b16 %v62
    %v374 = vunpack.c.h.b16 %v62
    %v375 = vunpack.c.l.b16 %v63
    %v376 = vunpack.c.h.b16 %v63
    %v377 = vunpack.c.l.b16 %v64
    %v378 = vunpack.c.h.b16 %v64
    %v379 = vunpack.c.l.b16 %v65
    %v380 = vunpack.c.h.b16 %v65
    %v381 = vunpack.c.l.b16 %v66
    %v382 = vunpack.c.h.b16 %v66
    %v383 = vunpack.c.l.b16 %v67
    %v384 = vunpack.c.h.b16 %v67
    %v385 = vunpack.c.l.b16 %v68
    %v386 = vunpack.c.h.b16 %v68
    %v387 = vunpack.c.l.b16 %v69
    %v388 = vunpack.c.h.b16 %v69
    %v389 = vunpack.c.l.b16 %v70
    %v390 = vunpack.c.h.b16 %v70
    %v391 = vunpack.c.l.b16 %v71
    %v392 = vunpack.c.h.b16 %v71
    %v393 = vunpack.c.l.b16 %v72
    %v394 = vunpack.c.h.b16 %v72
    %v395 = vunpack.c.l.b16 %v73
    %v396 = vunpack.c.h.b16 %v73
    %v397 = vunpack.c.l.b16 %v74
    %v398 = vunpack.c.h.b16 %v74
    %v399 = vunpack.c.l.b16 %v75
    %v400 = vunpack.c.h.b16 %v75
    %v401 = vunpack.c.l.b16 %v76
    %v402 = vunpack.c.h.b16 %v76
    %v403 = vunpack.c.l.b16 %v77
    %v404 = vunpack.c.h.b16 %v77
    %v405 = vunpack.c.l.b16 %v78
    %v406 = vunpack.c.h.b16 %v78
    %v407 = vunpack.c.l.b16 %v79
    %v408 = vunpack.c.h.b16 %v79
    %v409 = vunpack.c.l.b16 %v80
    %v410 = vunpack.c.h.b16 %v80
    %v411 = vunpack.c.l.b16 %v81
    %v412 = vunpack.c.h.b16 %v81
    %v413 = vunpack.c.l.b16 %v82
    %v414 = vunpack.c.h.b16 %v82
    %v415 = vunpack.c.l.b16 %v83
    %v416 = vunpack.c.h.b16 %v83
    %v417 = vunpack.c.l.b16 %v84
    %v418 = vunpack.c.h.b16 %v84
    %v419 = vunpack.c.l.b16 %v85
    %v420 = vunpack.c.h.b16 %v85
    %v421 = vunpack.c.l.b16 %v86
    %v422 = vunpack.c.h.b16 %v86
    %v423 = vunpack.c.l.b16 %v87
    %v424 = vunpack.c.h.b16 %v87
    %v425 = vunpack.c.l.b16 %v88
    %v426 = vunpack.c.h.b16 %v88
    %v427 = vunpack.c.l.b16 %v89
    %v428 = vunpack.c.h.b16 %v89
    %v429 = vunpack.c.l.b16 %v90
    %v430 = vunpack.c.h.b16 %v90
    %v431 = vunpack.c.l.b16 %v91
    %v432 = vunpack.c.h.b16 %v91
    %v433 = vunpack.c.l.b16 %v92
    %v434 = vunpack.c.h.b16 %v92
    %v435 = vunpack.c.l.b16 %v93
    %v436 = vunpack.c.h.b16 %v93
    %v437 = vunpack.c.l.b16 %v94
    %v438 = vunpack.c.h.b16 %v94
    %v439 = vunpack.c.l.b16 %v95
    %v440 = vunpack.c.h.b16 %v95
    %v441 = vunpack.c.l.b16 %v96
    %v442 = vunpack.c.h.b16 %v96
    %v443 = vunpack.c.l.b16 %v97
    %v444 = vunpack.c.h.b16 %v97
    %v445 = vunpack.c.l.b16 %v98
    %v446 = vunpack.c.h.b16 %v98
    %v447 = vunpack.c.l.b16 %v99
    %v448 = vunpack.c.h.b16 %v99
    %v449 = vunpack.c.l.b16 %v100
    %v450 = vunpack.c.h.b16 %v100
    %v451 = vunpack.c.l.b16 %v101
    %v452 = vunpack.c.h.b16 %v101
    %v453 = vunpack.c.l.b16 %v102
    %v454 = vunpack.c.h.b16 %v102
    %v455 = vunpack.c.l.b16 %v103
    %v456 = vunpack.c.h.b16 %v103
    %v457 = vunpack.c.l.b16 %v104
    %v458 = vunpack.c.h.b16 %v104
    %v459 = vunpack.c.l.b16 %v105
    %v460 = vunpack.c.h.b16 %v105
    %v461 = vunpack.c.l.b16 %v106
    %v462 = vunpack.c.h.b16 %v106
    %v463 = vunpack.c.l.b16 %v107
    %v464 = vunpack.c.h.b16 %v107
    %v465 = vunpack.c.l.b16 %v108
    %v466 = vunpack.c.h.b16 %v108
    %v467 = vunpack.c.l.b16 %v109
    %v468 = vunpack.c.h.b16 %v109
    %v469 = vunpack.c.l.b16 %v110
    %v470 = vunpack.c.h.b16 %v110
    %v471 = vunpack.c.l.b16 %v111
    %v472 = vunpack.c.h.b16 %v111
    %v473 = vunpack.c.l.b16 %v112
    %v474 = vunpack.c.h.b16 %v112
    %v475 = vunpack.c.l.b16 %v113
    %v476 = vunpack.c.h.b16 %v113
    %v477 = vunpack.c.l.b16 %v114
    %v478 = vunpack.c.h.b16 %v114
    %v479 = vunpack.c.l.b16 %v115
    %v480 = vunpack.c.h.b16 %v115
    %v481 = vunpack.c.l.b16 %v116
    %v482 = vunpack.c.h.b16 %v116
    %v483 = vunpack.c.l.b16 %v117
    %v484 = vunpack.c.h.b16 %v117
    %v485 = vunpack.c.l.b16 %v118
    %v486 = vunpack.c.h.b16 %v118
    %v487 = vunpack.c.l.b16 %v119
    %v488 = vunpack.c.h.b16 %v119
    %v489 = vunpack.c.l.b16 %v120
    %v490 = vunpack.c.h.b16 %v120
    %v491 = vunpack.c.l.b16 %v121
    %v492 = vunpack.c.h.b16 %v121
    %v493 = vunpack.c.l.b16 %v122
    %v494 = vunpack.c.h.b16 %v122
    %v495 = vunpack.c.l.b16 %v123
    %v496 = vunpack.c.h.b16 %v123
    %v497 = vunpack.c.l.b16 %v124
    %v498 = vunpack.c.h.b16 %v124
    %v499 = vunpack.c.l.b16 %v125
    %v500 = vunpack.c.h.b16 %v125
    %v501 = vunpack.c.l.b16 %v126
    %v502 = vunpack.c.h.b16 %v126
    %v503 = vunpack.c.l.b16 %v127
    %v504 = vunpack.c.h.b16 %v127
    %v505 = vunpack.c.l.b16 %v128
    %v506 = vunpack.c.h.b16 %v128
    %v507 = vunpack.c.l.b16 %v129
    %v508 = vunpack.c.h.b16 %v129
    %v509 = vunpack.c.l.b16 %v130
    %v510 = vunpack.c.h.b16 %v130
    %v511 = vunpack.c.l.b16 %v131
    %v512 = vunpack.c.h.b16 %v131
    %v513 = vunpack.c.l.b16 %v132
    %v514 = vunpack.c.h.b16 %v132
    %v515 = vunpack.c.l.b16 %v133
    %v516 = vunpack.c.h.b16 %v133
    %v517 = vunpack.c.l.b16 %v134
    %v518 = vunpack.c.h.b16 %v134
    %v519 = vunpack.c.l.b16 %v135
    %v520 = vunpack.c.h.b16 %v135
    %v521 = vunpack.c.l.b16 %v136
    %v522 = vunpack.c.h.b16 %v136
    %v523 = vunpack.c.l.b16 %v137
    %v524 = vunpack.c.h.b16 %v137
    %v525 = vunpack.c.l.b16 %v138
    %v526 = vunpack.c.h.b16 %v138
    %v527 = vunpack.c.l.b16 %v139
    %v528 = vunpack.c.h.b16 %v139
    %v529 = vunpack.c.l.b16 %v140
    %v530 = vunpack.c.h.b16 %v140
    %v531 = vunpack.c.l.b16 %v141
    %v532 = vunpack.c.h.b16 %v141
    %v533 = vunpack.c.l.b16 %v142
    %v534 = vunpack.c.h.b16 %v142
    %v535 = vunpack.c.l.b16 %v143
    %v536 = vunpack.c.h.b16 %v143
    %v537 = vunpack.c.l.b16 %v144
    %v538 = vunpack.c.h.b16 %v144
    %v539 = vunpack.c.l.b16 %v145
    %v540 = vunpack.c.h.b16 %v145
    %v541 = vunpack.c.l.b16 %v146
    %v542 = vunpack.c.h.b16 %v146
    %v543 = vunpack.c.l.b16 %v147
    %v544 = vunpack.c.h.b16 %v147
    %v545 = vunpack.c.l.b16 %v148
    %v546 = vunpack.c.h.b16 %v148
    %v547 = vunpack.c.l.b16 %v149
    %v548 = vunpack.c.h.b16 %v149
    %v549 = vunpack.c.l.b16 %v150
    %v550 = vunpack.c.h.b16 %v150
    %v551 = vunpack.c.l.b16 %v151
    %v552 = vunpack.c.h.b16 %v151
    %v553 = vunpack.c.l.b16 %v152
    %v554 = vunpack.c.h.b16 %v152
    %v555 = vunpack.c.l.b16 %v153
    %v556 = vunpack.c.h.b16 %v153
    %v557 = vunpack.c.l.b16 %v154
    %v558 = vunpack.c.h.b16 %v154
    %v559 = vunpack.c.l.b16 %v155
    %v560 = vunpack.c.h.b16 %v155
    %v561 = vunpack.c.l.b16 %v156
    %v562 = vunpack.c.h.b16 %v156
    %v563 = vunpack.c.l.b16 %v157
    %v564 = vunpack.c.h.b16 %v157
    %v565 = vunpack.c.l.b16 %v158
    %v566 = vunpack.c.h.b16 %v158
    %v567 = vunpack.c.l.b16 %v159
    %v568 = vunpack.c.h.b16 %v159
    %v569 = vunpack.c.l.b16 %v160
    %v570 = vunpack.c.h.b16 %v160
    %v571 = vunpack.c.l.b16 %v161
    %v572 = vunpack.c.h.b16 %v161
    %v573 = vunpack.c.l.b16 %v162
    %v574 = vunpack.c.h.b16 %v162
    %v575 = vunpack.c.l.b16 %v163
    %v576 = vunpack.c.h.b16 %v163
    %v577 = vunpack.c.l.b16 %v164
    %v578 = vunpack.c.h.b16 %v164
    %v579 = vunpack.c.l.b16 %v165
    %v580 = vunpack.c.h.b16 %v165
    %v581 = vunpack.c.l.b16 %v166
    %v582 = vunpack.c.h.b16 %v166
    %v583 = vunpack.c.l.b16 %v167
    %v584 = vunpack.c.h.b16 %v167
    %v585 = vunpack.c.l.b16 %v168
    %v586 = vunpack.c.h.b16 %v168
    %v587 = vunpack.c.l.b16 %v169
    %v588 = vunpack.c.h.b16 %v169
    %v589 = vunpack.c.l.b16 %v170
    %v590 = vunpack.c.h.b16 %v170
    %v591 = vpack.c.b16 %v339, %v335
    %v592 = vpack.c.b16 %v340, %v336
    %v593 = vpack.c.b16 %v341, %v337
    %v594 = vpack.c.b16 %v342, %v338
    %v595 = vpack.c.b16 %v347, %v343
    %v596 = vpack.c.b16 %v348, %v344
    %v597 = vpack.c.b16 %v349, %v345
    %v598 = vpack.c.b16 %v350, %v346
    %v599 = vpack.c.b16 %v355, %v351
    %v600 = vpack.c.b16 %v356, %v352
    %v601 = vpack.c.b16 %v357, %v353
    %v602 = vpack.c.b16 %v358, %v354
    %v603 = vpack.c.b16 %v363, %v359
    %v604 = vpack.c.b16 %v364, %v360
    %v605 = vpack.c.b16 %v365, %v361
    %v606 = vpack.c.b16 %v366, %v362
    %v607 = vpack.c.b16 %v371, %v367
    %v608 = vpack.c.b16 %v372, %v368
    %v609 = vpack.c.b16 %v373, %v369
    %v610 = vpack.c.b16 %v374, %v370
    %v611 = vpack.c.b16 %v379, %v375
    %v612 = vpack.c.b16 %v380, %v376
    %v613 = vpack.c.b16 %v381, %v377
    %v614 = vpack.c.b16 %v382, %v378
    %v615 = vpack.c.b16 %v387, %v383
    %v616 = vpack.c.b16 %v388, %v384
    %v617 = vpack.c.b16 %v389, %v385
    %v618 = vpack.c.b16 %v390, %v386
    %v619 = vpack.c.b16 %v395, %v391
    %v620 = vpack.c.b16 %v396, %v392
    %v621 = vpack.c.b16 %v397, %v393
    %v622 = vpack.c.b16 %v398, %v394
    %v623 = vpack.c.b16 %v403, %v399
    %v624 = vpack.c.b16 %v404, %v400
    %v625 = vpack.c.b16 %v405, %v401
    %v626 = vpack.c.b16 %v406, %v402
    %v627 = vpack.c.b16 %v411, %v407
    %v628 = vpack.c.b16 %v412, %v408
    %v629 = vpack.c.b16 %v413, %v409
    %v630 = vpack.c.b16 %v414, %v410
    %v631 = vpack.c.b16 %v419, %v415
    %v632 = vpack.c.b16 %v420, %v416
    %v633 = vpack.c.b16 %v421, %v417
    %v634 = vpack.c.b16 %v422, %v418
    %v635 = vpack.c.b16 %v427, %v423
    %v636 = vpack.c.b16 %v428, %v424
    %v637 = vpack.c.b16 %v429, %v425
    %v638 = vpack.c.b16 %v430, %v426
    %v639 = vpack.c.b16 %v435, %v431
    %v640 = vpack.c.b16 %v436, %v432
    %v641 = vpack.c.b16 %v437, %v433
    %v642 = vpack.c.b16 %v438, %v434
    %v643 = vpack.c.b16 %v443, %v439
    %v644 = vpack.c.b16 %v444, %v440
    %v645 = vpack.c.b16 %v445, %v441
    %v646 = vpack.c.b16 %v446, %v442
    %v647 = vpack.c.b16 %v451, %v447
    %v648 = vpack.c.b16 %v452, %v448
    %v649 = vpack.c.b16 %v453, %v449
    %v650 = vpack.c.b16 %v454, %v450
    %v651 = vpack.c.b16 %v459, %v455
    %v652 = vpack.c.b16 %v460, %v456
    %v653 = vpack.c.b16 %v461, %v457
    %v654 = vpack.c.b16 %v462, %v458
    %v655 = vpack.c.b16 %v467, %v463
    %v656 = vpack.c.b16 %v468, %v464
    %v657 = vpack.c.b16 %v469, %v465
    %v658 = vpack.c.b16 %v470, %v466
    %v659 = vpack.c.b16 %v475, %v471
    %v660 = vpack.c.b16 %v476, %v472
    %v661 = vpack.c.b16 %v477, %v473
    %v662 = vpack.c.b16 %v478, %v474
    %v663 = vpack.c.b16 %v483, %v479
    %v664 = vpack.c.b16 %v484, %v480
    %v665 = vpack.c.b16 %v485, %v481
    %v666 = vpack.c.b16 %v486, %v482
    %v667 = vpack.c.b16 %v491, %v487
    %v668 = vpack.c.b16 %v492, %v488
    %v669 = vpack.c.b16 %v493, %v489
    %v670 = vpack.c.b16 %v494, %v490
    %v671 = vpack.c.b16 %v499, %v495
    %v672 = vpack.c.b16 %v500, %v496
    %v673 = vpack.c.b16 %v501, %v497
    %v674 = vpack.c.b16 %v502, %v498
    %v675 = vpack.c.b16 %v507, %v503
    %v676 = vpack.c.b16 %v508, %v504
    %v677 = vpack.c.b16 %v509, %v505
    %v678 = vpack.c.b16 %v510, %v506
    %v679 = vpack.c.b16 %v515, %v511
    %v680 = vpack.c.b16 %v516, %v512
    %v681 = vpack.c.b16 %v517, %v513
    %v682 = vpack.c.b16 %v518, %v514
    %v683 = vpack.c.b16 %v523, %v519
    %v684 = vpack.c.b16 %v524, %v520
    %v685 = vpack.c.b16 %v525, %v521
    %v686 = vpack.c.b16 %v526, %v522
    %v687 = vpack.c.b16 %v531, %v527
    %v688 = vpack.c.b16 %v532, %v528
    %v689 = vpack.c.b16 %v533, %v529
    %v690 = vpack.c.b16 %v534, %v530
    %v691 = vpack.c.b16 %v539, %v535
    %v692 = vpack.c.b16 %v540, %v536
    %v693 = vpack.c.b16 %v541, %v537
    %v694 = vpack.c.b16 %v542, %v538
    %v695 = vpack.c.b16 %v547, %v543
    %v696 = vpack.c.b16 %v548, %v544
    %v697 = vpack.c.b16 %v549, %v545
    %v698 = vpack.c.b16 %v550, %v546
    %v699 = vpack.c.b16 %v555, %v551
    %v700 = vpack.c.b16 %v556, %v552
    %v701 = vpack.c.b16 %v557, %v553
    %v702 = vpack.c.b16 %v558, %v554
    %v703 = vpack.c.b16 %v563, %v559
    %v704 = vpack.c.b16 %v564, %v560
    %v705 = vpack.c.b16 %v565, %v561
    %v706 = vpack.c.b16 %v566, %v562
    %v707 = vpack.c.b16 %v571, %v567
    %v708 = vpack.c.b16 %v572, %v568
    %v709 = vpack.c.b16 %v573, %v569
    %v710 = vpack.c.b16 %v574, %v570
    %v711 = vpack.c.b16 %v579, %v575
    %v712 = vpack.c.b16 %v580, %v576
    %v713 = vpack.c.b16 %v581, %v577
    %v714 = vpack.c.b16 %v582, %v578
    %v715 = vpack.c.b16 %v587, %v583
    %v716 = vpack.c.b16 %v588, %v584
    %v717 = vpack.c.b16 %v589, %v585
    %v718 = vpack.c.b16 %v590, %v586
    %847 = vmatprep.subr.bf16.mxu0 %v592
    %848 = vmatpush1.bf16.msra.mxu0 %v591
    %849 = vmatprep.subr.bf16.mxu0 %v596
    %850 = vmatpush1.bf16.msra.mxu0 %v595
    %851 = vmatprep.subr.bf16.mxu0 %v600
    %852 = vmatpush1.bf16.msra.mxu0 %v599
    %853 = vmatprep.subr.bf16.mxu0 %v604
    %854 = vmatpush1.bf16.msra.mxu0 %v603
    %855 = vmatprep.subr.bf16.mxu0 %v608
    %856 = vmatpush1.bf16.msra.mxu0 %v607
    %857 = vmatprep.subr.bf16.mxu0 %v612
    %858 = vmatpush1.bf16.msra.mxu0 %v611
    %859 = vmatprep.subr.bf16.mxu0 %v616
    %860 = vmatpush1.bf16.msra.mxu0 %v615
    %861 = vmatprep.subr.bf16.mxu0 %v620
    %862 = vmatpush1.bf16.msra.mxu0 %v619
    %863 = vmatprep.subr.bf16.mxu0 %v624
    %864 = vmatpush1.bf16.msra.mxu0 %v623
    %865 = vmatprep.subr.bf16.mxu0 %v628
    %866 = vmatpush1.bf16.msra.mxu0 %v627
    %867 = vmatprep.subr.bf16.mxu0 %v632
    %868 = vmatpush1.bf16.msra.mxu0 %v631
    %869 = vmatprep.subr.bf16.mxu0 %v636
    %870 = vmatpush1.bf16.msra.mxu0 %v635
    %871 = vmatprep.subr.bf16.mxu0 %v640
    %872 = vmatpush1.bf16.msra.mxu0 %v639
    %873 = vmatprep.subr.bf16.mxu0 %v644
    %874 = vmatpush1.bf16.msra.mxu0 %v643
    %875 = vmatprep.subr.bf16.mxu0 %v648
    %876 = vmatpush1.bf16.msra.mxu0 %v647
    %877 = vmatprep.subr.bf16.mxu0 %v652
    %878 = vmatpush1.bf16.msra.mxu0 %v651
    %879 = vmatprep.mubr.bf16.mxu0 %v200
    %880 = vmatmul.mubr.bf16.gmra.mrb[0].mxu0 %v199
    %v881 = vpop.f32.mrb[0].mxu0
    %v882 = vadd.f32 %v176, %v881
    %v883 = vpop.f32.mrb[0].mxu0
    %v884 = vadd.f32 %v180, %v883
    %v885 = vpop.f32.mrb[0].mxu0
    %v886 = vpop.f32.mrb[0].mxu0
    %887 = vdwg.mxu0
    %888 = vmatprep.subr.bf16.mxu0 %v656
    %889 = vmatpush1.bf16.msra.mxu0 %v655
    %890 = vmatprep.subr.bf16.mxu0 %v660
    %891 = vmatpush1.bf16.msra.mxu0 %v659
    %892 = vmatprep.subr.bf16.mxu0 %v664
    %893 = vmatpush1.bf16.msra.mxu0 %v663
    %894 = vmatprep.subr.bf16.mxu0 %v668
    %895 = vmatpush1.bf16.msra.mxu0 %v667
    %896 = vmatprep.subr.bf16.mxu0 %v672
    %897 = vmatpush1.bf16.msra.mxu0 %v671
    %898 = vmatprep.subr.bf16.mxu0 %v676
    %899 = vmatpush1.bf16.msra.mxu0 %v675
    %900 = vmatprep.subr.bf16.mxu0 %v680
    %901 = vmatpush1.bf16.msra.mxu0 %v679
    %902 = vmatprep.subr.bf16.mxu0 %v684
    %903 = vmatpush1.bf16.msra.mxu0 %v683
    %904 = vmatprep.subr.bf16.mxu0 %v688
    %905 = vmatpush1.bf16.msra.mxu0 %v687
    %906 = vmatprep.subr.bf16.mxu0 %v692
    %907 = vmatpush1.bf16.msra.mxu0 %v691
    %908 = vmatprep.subr.bf16.mxu0 %v696
    %909 = vmatpush1.bf16.msra.mxu0 %v695
    %910 = vmatprep.subr.bf16.mxu0 %v700
    %911 = vmatpush1.bf16.msra.mxu0 %v699
    %912 = vmatprep.subr.bf16.mxu0 %v704
    %913 = vmatpush1.bf16.msra.mxu0 %v703
    %914 = vmatprep.subr.bf16.mxu0 %v708
    %915 = vmatpush1.bf16.msra.mxu0 %v707
    %916 = vmatprep.subr.bf16.mxu0 %v712
    %917 = vmatpush1.bf16.msra.mxu0 %v711
    %918 = vmatprep.subr.bf16.mxu0 %v716
    %919 = vmatpush1.bf16.msra.mxu0 %v715
    %920 = vmatprep.mubr.bf16.mxu0 %v202
    %921 = vmatmul.mubr.bf16.gmra.mrb[0].mxu0 %v201
    %v922 = vpop.f32.mrb[0].mxu0
    %v923 = vadd.f32 %v882, %v922
    %v924 = vpop.f32.mrb[0].mxu0
    %v925 = vadd.f32 %v884, %v924
    %v926 = vpop.f32.mrb[0].mxu0
    %v927 = vpop.f32.mrb[0].mxu0
    %928 = vdwg.mxu0
    %929 = vmatprep.subr.bf16.mxu0 %v594
    %930 = vmatpush1.bf16.msra.mxu0 %v593
    %931 = vmatprep.subr.bf16.mxu0 %v598
    %932 = vmatpush1.bf16.msra.mxu0 %v597
    %933 = vmatprep.subr.bf16.mxu0 %v602
    %934 = vmatpush1.bf16.msra.mxu0 %v601
    %935 = vmatprep.subr.bf16.mxu0 %v606
    %936 = vmatpush1.bf16.msra.mxu0 %v605
    %937 = vmatprep.subr.bf16.mxu0 %v610
    %938 = vmatpush1.bf16.msra.mxu0 %v609
    %939 = vmatprep.subr.bf16.mxu0 %v614
    %940 = vmatpush1.bf16.msra.mxu0 %v613
    %941 = vmatprep.subr.bf16.mxu0 %v618
    %942 = vmatpush1.bf16.msra.mxu0 %v617
    %943 = vmatprep.subr.bf16.mxu0 %v622
    %944 = vmatpush1.bf16.msra.mxu0 %v621
    %945 = vmatprep.subr.bf16.mxu0 %v626
    %946 = vmatpush1.bf16.msra.mxu0 %v625
    %947 = vmatprep.subr.bf16.mxu0 %v630
    %948 = vmatpush1.bf16.msra.mxu0 %v629
    %949 = vmatprep.subr.bf16.mxu0 %v634
    %950 = vmatpush1.bf16.msra.mxu0 %v633
    %951 = vmatprep.subr.bf16.mxu0 %v638
    %952 = vmatpush1.bf16.msra.mxu0 %v637
    %953 = vmatprep.subr.bf16.mxu0 %v642
    %954 = vmatpush1.bf16.msra.mxu0 %v641
    %955 = vmatprep.subr.bf16.mxu0 %v646
    %956 = vmatpush1.bf16.msra.mxu0 %v645
    %957 = vmatprep.subr.bf16.mxu0 %v650
    %958 = vmatpush1.bf16.msra.mxu0 %v649
    %959 = vmatprep.subr.bf16.mxu0 %v654
    %960 = vmatpush1.bf16.msra.mxu0 %v653
    %961 = vmatprep.mubr.bf16.mxu0 %v200
    %962 = vmatmul.mubr.bf16.gmra.mrb[0].mxu0 %v199
    %v963 = vpop.f32.mrb[0].mxu0
    %v964 = vadd.f32 %v184, %v963
    %v965 = vpop.f32.mrb[0].mxu0
    %v966 = vadd.f32 %v188, %v965
    %v967 = vpop.f32.mrb[0].mxu0
    %v968 = vpop.f32.mrb[0].mxu0
    %969 = vdwg.mxu0
    %970 = vmatprep.subr.bf16.mxu0 %v658
    %971 = vmatpush1.bf16.msra.mxu0 %v657
    %972 = vmatprep.subr.bf16.mxu0 %v662
    %973 = vmatpush1.bf16.msra.mxu0 %v661
    %974 = vmatprep.subr.bf16.mxu0 %v666
    %975 = vmatpush1.bf16.msra.mxu0 %v665
    %976 = vmatprep.subr.bf16.mxu0 %v670
    %977 = vmatpush1.bf16.msra.mxu0 %v669
    %978 = vmatprep.subr.bf16.mxu0 %v674
    %979 = vmatpush1.bf16.msra.mxu0 %v673
    %980 = vmatprep.subr.bf16.mxu0 %v678
    %981 = vmatpush1.bf16.msra.mxu0 %v677
    %982 = vmatprep.subr.bf16.mxu0 %v682
    %983 = vmatpush1.bf16.msra.mxu0 %v681
    %984 = vmatprep.subr.bf16.mxu0 %v686
    %985 = vmatpush1.bf16.msra.mxu0 %v685
    %986 = vmatprep.subr.bf16.mxu0 %v690
    %987 = vmatpush1.bf16.msra.mxu0 %v689
    %988 = vmatprep.subr.bf16.mxu0 %v694
    %989 = vmatpush1.bf16.msra.mxu0 %v693
    %990 = vmatprep.subr.bf16.mxu0 %v698
    %991 = vmatpush1.bf16.msra.mxu0 %v697
    %992 = vmatprep.subr.bf16.mxu0 %v702
    %993 = vmatpush1.bf16.msra.mxu0 %v701
    %994 = vmatprep.subr.bf16.mxu0 %v706
    %995 = vmatpush1.bf16.msra.mxu0 %v705
    %996 = vmatprep.subr.bf16.mxu0 %v710
    %997 = vmatpush1.bf16.msra.mxu0 %v709
    %998 = vmatprep.subr.bf16.mxu0 %v714
    %999 = vmatpush1.bf16.msra.mxu0 %v713
    %1000 = vmatprep.subr.bf16.mxu0 %v718
    %1001 = vmatpush1.bf16.msra.mxu0 %v717
    %1002 = vmatprep.mubr.bf16.mxu0 %v202
    %1003 = vmatmul.mubr.bf16.gmra.mrb[0].mxu0 %v201
    %v1004 = vpop.f32.mrb[0].mxu0
    %v1005 = vadd.f32 %v964, %v1004
    %v1006 = vpop.f32.mrb[0].mxu0
    %v1007 = vadd.f32 %v966, %v1006
    %v1008 = vpop.f32.mrb[0].mxu0
    %v1009 = vpop.f32.mrb[0].mxu0
    %1010 = vdwg.mxu0
    %v1011 = vmax.f32 %v923, 0.0
    %v1012 = vmax.f32 %v925, 0.0
    %v1013 = vmax.f32 %v1005, 0.0
    %v1014 = vmax.f32 %v1007, 0.0
    %v1015 = vunpack.c.l.bf16 %v41
    %v1016 = vunpack.c.h.bf16 %v41
    %v1017 = vunpack.c.l.bf16 %v42
    %v1018 = vunpack.c.h.bf16 %v42
    %v1019 = vadd.f32 %v1011, %v1015
    %v1020 = vadd.f32 %v1012, %v1016
    %v1021 = vadd.f32 %v1013, %v1017
    %v1022 = vadd.f32 %v1014, %v1018
    %1023 = vst [vmem:[#allocation7] sm:$0xff] %v1019
    %1024 = vst [vmem:[#allocation7 + $0x8] sm:$0xff] %v1020
    %1025 = vst [vmem:[#allocation7 + $0x10] sm:$0xff] %v1021
    %1026 = vst [vmem:[#allocation7 + $0x18] sm:$0xff] %v1022
    // Predicated region
    $region22: #{tpu_custom_call.1} parent=1 // pred_check
      _
    $region23: #{tpu_custom_call.1} parent=1 // pred_check_branch
      %1028 = sbr.rel (0) target = $region25
    $region24: #{tpu_custom_call.1} parent=1 // pred_region
      %s1030 = ssub.s32 512, 512
      %1031 = vsyncadd [#allocation4], %s1030
      %s1033 = sshll.u32 [#allocation7], 4
      %s1034 = int_to_ptr.vmem [resolvable:$true] %s1033
      %1036 = dma.vmem_to_hbm [thread:$0]  %s1034, 512, %s3, [#allocation4]
    $region25: #{tpu_custom_call.1} parent=1 // pred_fallthru
      _
    // Predicated region
    $region26: #{tpu_custom_call.1} parent=1 // pred_check
      _
    $region27: #{tpu_custom_call.1} parent=1 // pred_check_branch
      %1038 = sbr.rel (0) target = $region29
    $region28: #{tpu_custom_call.1} parent=1 // pred_region
      %1039 = dma.done [#allocation4], 512
    $region29: #{tpu_custom_call.1} parent=1 // pred_fallthru
      _
    %1040 = vsyncpa [#allocation3], 1
    %1041 = vsyncpa [#allocation6], 1
    %1042 = vsyncpa [#allocation4], 1

// kernel: tpu_custom_call.1
$region0: #{tpu_custom_call.1}
  #allocation0 [shape = 'u32[]', space=smem, size = 0x4, offset = 0x4, fixed_abs, tag = 'smem constant byte address 0x4 - core index']
  #allocation1 [shape = 'u32[144,128]{1,0:T(1,128)}', space=vmem, size = 0x12000, scoped, tag = 'internal scratch']
  %s0 = inlined_call_operand.hbm [shape: bf16[8,512], index: 0, kind: input, shape index: {}]
  %s1 = inlined_call_operand.hbm [shape: bf16[512,512], index: 1, kind: input, shape index: {}]
  %s2 = inlined_call_operand.vmem [shape: f32[1,512], index: 2, kind: input, shape index: {}]
  %s3 = inlined_call_operand.hbm [shape: f32[8,512], index: 3, kind: output, shape index: {}]
  %s4 = sld [smem:[#allocation0]]
  $region30: #{tpu_custom_call.1} parent=0
    _
  %s6 = ssub.s32 1, %s4
  %s7 = scalar_select 0, %s6, %s4
  $region1: #{tpu_custom_call.1} parent=0
    #allocation2 [shape = 'u8[8192]{0}', space=vmem, size = 0x2000, scoped, tag = 'input window, operand 0, single buffered']
    #allocation3 [shape = 's32[1]{0}', space=sflag, size = 0x4, scoped, tag = 'scoped memory for tpu_custom_call.1']
    #allocation4 [shape = 's32[1]{0}', space=sflag, size = 0x4, scoped, tag = 'scoped memory for tpu_custom_call.1']
    #allocation5 [shape = 'u8[524288]{0}', space=vmem, size = 0x80000, scoped, tag = 'input window, operand 1, single buffered']
    #allocation6 [shape = 's32[1]{0}', space=sflag, size = 0x4, scoped, tag = 'scoped memory for tpu_custom_call.1']
    #allocation7 [shape = 'u8[16384]{0}', space=vmem, size = 0x4000, scoped, tag = 'output window, operand 0, single buffered']
    %8 = vsyncpa [#allocation3], 0
    %9 = vsyncpa [#allocation6], 0
    %10 = vsyncpa [#allocation4], 0
    // Predicated region
    $region2: #{tpu_custom_call.1} parent=1 // pred_check
      _
    $region3: #{tpu_custom_call.1} parent=1 // pred_check_branch
      %12 = sbr.rel (0) target = $region5
    $region4: #{tpu_custom_call.1} parent=1 // pred_region
      %s14 = ssub.s32 256, 256
      %15 = vsyncadd [#allocation3], %s14
      %s17 = sshll.u32 [#allocation2], 4
      %s18 = int_to_ptr.vmem [resolvable:$true] %s17
      %20 = dma.hbm_to_vmem [thread:$0]  %s0, 256, %s18, [#allocation3]
    $region5: #{tpu_custom_call.1} parent=1 // pred_fallthru
      _
    // Predicated region
    $region6: #{tpu_custom_call.1} parent=1 // pred_check
      _
    $region7: #{tpu_custom_call.1} parent=1 // pred_check_branch
      %22 = sbr.rel (0) target = $region9
    $region8: #{tpu_custom_call.1} parent=1 // pred_region
      %s24 = ssub.s32 16384, 16384
      %25 = vsyncadd [#allocation6], %s24
      %s26 = sshll.u32 [#allocation5], 4
      %s27 = int_to_ptr.vmem [resolvable:$true] %s26
      %32 = dma.hbm_to_vmem [thread:$0]  %s1, 16384, %s27, [#allocation6], 256, 256, 16
    $region9: #{tpu_custom_call.1} parent=1 // pred_fallthru
      _
    // Predicated region
    $region10: #{tpu_custom_call.1} parent=1 // pred_check
      _
    $region11: #{tpu_custom_call.1} parent=1 // pred_check_branch
      %34 = sbr.rel (0) target = $region13
    $region12: #{tpu_custom_call.1} parent=1 // pred_region
      _
    $region13: #{tpu_custom_call.1} parent=1 // pred_fallthru
      _
    // Predicated region
    $region14: #{tpu_custom_call.1} parent=1 // pred_check
      _
    $region15: #{tpu_custom_call.1} parent=1 // pred_check_branch
      %36 = sbr.rel (0) target = $region17
    $region16: #{tpu_custom_call.1} parent=1 // pred_region
      %37 = dma.done [#allocation3], 256
    $region17: #{tpu_custom_call.1} parent=1 // pred_fallthru
      _
    // Predicated region
    $region18: #{tpu_custom_call.1} parent=1 // pred_check
      _
    $region19: #{tpu_custom_call.1} parent=1 // pred_check_branch
      %39 = sbr.rel (0) target = $region21
    $region20: #{tpu_custom_call.1} parent=1 // pred_region
      %40 = dma.done [#allocation6], 16384
    $region21: #{tpu_custom_call.1} parent=1 // pred_fallthru
      _
    %v41 = vld [vmem:[#allocation2] sm:$0xff]
    %v42 = vld [vmem:[#allocation2 + $0x8] sm:$0xff]
    %v43 = vld [vmem:[#allocation5] sm:$0xff]
    %v44 = vld [vmem:[#allocation5 + $0x8] sm:$0xff]
    %v45 = vld [vmem:[#allocation5 + $0x10] sm:$0xff]
    %v46 = vld [vmem:[#allocation5 + $0x18] sm:$0xff]
    %v47 = vld [vmem:[#allocation5 + $0x20] sm:$0xff]
    %v48 = vld [vmem:[#allocation5 + $0x28] sm:$0xff]
    %v49 = vld [vmem:[#allocation5 + $0x30] sm:$0xff]
    %v50 = vld [vmem:[#allocation5 + $0x38] sm:$0xff]
    %v51 = vld [vmem:[#allocation5 + $0x40] sm:$0xff]
    %v52 = vld [vmem:[#allocation5 + $0x48] sm:$0xff]
    %v53 = vld [vmem:[#allocation5 + $0x50] sm:$0xff]
    %v54 = vld [vmem:[#allocation5 + $0x58] sm:$0xff]
    %v55 = vld [vmem:[#allocation5 + $0x60] sm:$0xff]
    %v56 = vld [vmem:[#allocation5 + $0x68] sm:$0xff]
    %v57 = vld [vmem:[#allocation5 + $0x70] sm:$0xff]
    %v58 = vld [vmem:[#allocation5 + $0x78] sm:$0xff]
    %v59 = vld [vmem:[#allocation5 + $0x80] sm:$0xff]
    %v60 = vld [vmem:[#allocation5 + $0x88] sm:$0xff]
    %v61 = vld [vmem:[#allocation5 + $0x90] sm:$0xff]
    %v62 = vld [vmem:[#allocation5 + $0x98] sm:$0xff]
    %v63 = vld [vmem:[#allocation5 + $0xa0] sm:$0xff]
    %v64 = vld [vmem:[#allocation5 + $0xa8] sm:$0xff]
    %v65 = vld [vmem:[#allocation5 + $0xb0] sm:$0xff]
    %v66 = vld [vmem:[#allocation5 + $0xb8] sm:$0xff]
    %v67 = vld [vmem:[#allocation5 + $0xc0] sm:$0xff]
    %v68 = vld [vmem:[#allocation5 + $0xc8] sm:$0xff]
    %v69 = vld [vmem:[#allocation5 + $0xd0] sm:$0xff]
    %v70 = vld [vmem:[#allocation5 + $0xd8] sm:$0xff]
    %v71 = vld [vmem:[#allocation5 + $0xe0] sm:$0xff]
    %v72 = vld [vmem:[#allocation5 + $0xe8] sm:$0xff]
    %v73 = vld [vmem:[#allocation5 + $0xf0] sm:$0xff]
    %v74 = vld [vmem:[#allocation5 + $0xf8] sm:$0xff]
    %v75 = vld [vmem:[#allocation5 + $0x100] sm:$0xff]
    %v76 = vld [vmem:[#allocation5 + $0x108] sm:$0xff]
    %v77 = vld [vmem:[#allocation5 + $0x110] sm:$0xff]
    %v78 = vld [vmem:[#allocation5 + $0x118] sm:$0xff]
    %v79 = vld [vmem:[#allocation5 + $0x120] sm:$0xff]
    %v80 = vld [vmem:[#allocation5 + $0x128] sm:$0xff]
    %v81 = vld [vmem:[#allocation5 + $0x130] sm:$0xff]
    %v82 = vld [vmem:[#allocation5 + $0x138] sm:$0xff]
    %v83 = vld [vmem:[#allocation5 + $0x140] sm:$0xff]
    %v84 = vld [vmem:[#allocation5 + $0x148] sm:$0xff]
    %v85 = vld [vmem:[#allocation5 + $0x150] sm:$0xff]
    %v86 = vld [vmem:[#allocation5 + $0x158] sm:$0xff]
    %v87 = vld [vmem:[#allocation5 + $0x160] sm:$0xff]
    %v88 = vld [vmem:[#allocation5 + $0x168] sm:$0xff]
    %v89 = vld [vmem:[#allocation5 + $0x170] sm:$0xff]
    %v90 = vld [vmem:[#allocation5 + $0x178] sm:$0xff]
    %v91 = vld [vmem:[#allocation5 + $0x180] sm:$0xff]
    %v92 = vld [vmem:[#allocation5 + $0x188] sm:$0xff]
    %v93 = vld [vmem:[#allocation5 + $0x190] sm:$0xff]
    %v94 = vld [vmem:[#allocation5 + $0x198] sm:$0xff]
    %v95 = vld [vmem:[#allocation5 + $0x1a0] sm:$0xff]
    %v96 = vld [vmem:[#allocation5 + $0x1a8] sm:$0xff]
    %v97 = vld [vmem:[#allocation5 + $0x1b0] sm:$0xff]
    %v98 = vld [vmem:[#allocation5 + $0x1b8] sm:$0xff]
    %v99 = vld [vmem:[#allocation5 + $0x1c0] sm:$0xff]
    %v100 = vld [vmem:[#allocation5 + $0x1c8] sm:$0xff]
    %v101 = vld [vmem:[#allocation5 + $0x1d0] sm:$0xff]
    %v102 = vld [vmem:[#allocation5 + $0x1d8] sm:$0xff]
    %v103 = vld [vmem:[#allocation5 + $0x1e0] sm:$0xff]
    %v104 = vld [vmem:[#allocation5 + $0x1e8] sm:$0xff]
    %v105 = vld [vmem:[#allocation5 + $0x1f0] sm:$0xff]
    %v106 = vld [vmem:[#allocation5 + $0x1f8] sm:$0xff]
    %v107 = vld [vmem:[#allocation5 + $0x200] sm:$0xff]
    %v108 = vld [vmem:[#allocation5 + $0x208] sm:$0xff]
    %v109 = vld [vmem:[#allocation5 + $0x210] sm:$0xff]
    %v110 = vld [vmem:[#allocation5 + $0x218] sm:$0xff]
    %v111 = vld [vmem:[#allocation5 + $0x220] sm:$0xff]
    %v112 = vld [vmem:[#allocation5 + $0x228] sm:$0xff]
    %v113 = vld [vmem:[#allocation5 + $0x230] sm:$0xff]
    %v114 = vld [vmem:[#allocation5 + $0x238] sm:$0xff]
    %v115 = vld [vmem:[#allocation5 + $0x240] sm:$0xff]
    %v116 = vld [vmem:[#allocation5 + $0x248] sm:$0xff]
    %v117 = vld [vmem:[#allocation5 + $0x250] sm:$0xff]
    %v118 = vld [vmem:[#allocation5 + $0x258] sm:$0xff]
    %v119 = vld [vmem:[#allocation5 + $0x260] sm:$0xff]
    %v120 = vld [vmem:[#allocation5 + $0x268] sm:$0xff]
    %v121 = vld [vmem:[#allocation5 + $0x270] sm:$0xff]
    %v122 = vld [vmem:[#allocation5 + $0x278] sm:$0xff]
    %v123 = vld [vmem:[#allocation5 + $0x280] sm:$0xff]
    %v124 = vld [vmem:[#allocation5 + $0x288] sm:$0xff]
    %v125 = vld [vmem:[#allocation5 + $0x290] sm:$0xff]
    %v126 = vld [vmem:[#allocation5 + $0x298] sm:$0xff]
    %v127 = vld [vmem:[#allocation5 + $0x2a0] sm:$0xff]
    %v128 = vld [vmem:[#allocation5 + $0x2a8] sm:$0xff]
    %v129 = vld [vmem:[#allocation5 + $0x2b0] sm:$0xff]
    %v130 = vld [vmem:[#allocation5 + $0x2b8] sm:$0xff]
    %v131 = vld [vmem:[#allocation5 + $0x2c0] sm:$0xff]
    %v132 = vld [vmem:[#allocation5 + $0x2c8] sm:$0xff]
    %v133 = vld [vmem:[#allocation5 + $0x2d0] sm:$0xff]
    %v134 = vld [vmem:[#allocation5 + $0x2d8] sm:$0xff]
    %v135 = vld [vmem:[#allocation5 + $0x2e0] sm:$0xff]
    %v136 = vld [vmem:[#allocation5 + $0x2e8] sm:$0xff]
    %v137 = vld [vmem:[#allocation5 + $0x2f0] sm:$0xff]
    %v138 = vld [vmem:[#allocation5 + $0x2f8] sm:$0xff]
    %v139 = vld [vmem:[#allocation5 + $0x300] sm:$0xff]
    %v140 = vld [vmem:[#allocation5 + $0x308] sm:$0xff]
    %v141 = vld [vmem:[#allocation5 + $0x310] sm:$0xff]
    %v142 = vld [vmem:[#allocation5 + $0x318] sm:$0xff]
    %v143 = vld [vmem:[#allocation5 + $0x320] sm:$0xff]
    %v144 = vld [vmem:[#allocation5 + $0x328] sm:$0xff]
    %v145 = vld [vmem:[#allocation5 + $0x330] sm:$0xff]
    %v146 = vld [vmem:[#allocation5 + $0x338] sm:$0xff]
    %v147 = vld [vmem:[#allocation5 + $0x340] sm:$0xff]
    %v148 = vld [vmem:[#allocation5 + $0x348] sm:$0xff]
    %v149 = vld [vmem:[#allocation5 + $0x350] sm:$0xff]
    %v150 = vld [vmem:[#allocation5 + $0x358] sm:$0xff]
    %v151 = vld [vmem:[#allocation5 + $0x360] sm:$0xff]
    %v152 = vld [vmem:[#allocation5 + $0x368] sm:$0xff]
    %v153 = vld [vmem:[#allocation5 + $0x370] sm:$0xff]
    %v154 = vld [vmem:[#allocation5 + $0x378] sm:$0xff]
    %v155 = vld [vmem:[#allocation5 + $0x380] sm:$0xff]
    %v156 = vld [vmem:[#allocation5 + $0x388] sm:$0xff]
    %v157 = vld [vmem:[#allocation5 + $0x390] sm:$0xff]
    %v158 = vld [vmem:[#allocation5 + $0x398] sm:$0xff]
    %v159 = vld [vmem:[#allocation5 + $0x3a0] sm:$0xff]
    %v160 = vld [vmem:[#allocation5 + $0x3a8] sm:$0xff]
    %v161 = vld [vmem:[#allocation5 + $0x3b0] sm:$0xff]
    %v162 = vld [vmem:[#allocation5 + $0x3b8] sm:$0xff]
    %v163 = vld [vmem:[#allocation5 + $0x3c0] sm:$0xff]
    %v164 = vld [vmem:[#allocation5 + $0x3c8] sm:$0xff]
    %v165 = vld [vmem:[#allocation5 + $0x3d0] sm:$0xff]
    %v166 = vld [vmem:[#allocation5 + $0x3d8] sm:$0xff]
    %v167 = vld [vmem:[#allocation5 + $0x3e0] sm:$0xff]
    %v168 = vld [vmem:[#allocation5 + $0x3e8] sm:$0xff]
    %v169 = vld [vmem:[#allocation5 + $0x3f0] sm:$0xff]
    %v170 = vld [vmem:[#allocation5 + $0x3f8] sm:$0xff]
    %v171 = vld [vmem:[%s2] sm:$0xf]
    %v173 = vlaneseq
    %v174 = vshrl.u32 %v173, 7
    %v175 = vsub.s32 0, %v174
    %v176 = vrot.slane %v171, %v175
    %v177 = vlaneseq
    %v178 = vshrl.u32 %v177, 7
    %v179 = vsub.s32 1, %v178
    %v180 = vrot.slane %v171, %v179
    %v181 = vlaneseq
    %v182 = vshrl.u32 %v181, 7
    %v183 = vsub.s32 2, %v182
    %v184 = vrot.slane %v171, %v183
    %v185 = vlaneseq
    %v186 = vshrl.u32 %v185, 7
    %v187 = vsub.s32 3, %v186
    %v188 = vrot.slane %v171, %v187
    %v195 = vunpack.c.l.b16 %v41
    %v196 = vunpack.c.h.b16 %v41
    %v197 = vunpack.c.l.b16 %v42
    %v198 = vunpack.c.h.b16 %v42
    %v199 = vpack.c.b16 %v195, %v195
    %v200 = vpack.c.b16 %v196, %v196
    %v201 = vpack.c.b16 %v197, %v197
    %v202 = vpack.c.b16 %v198, %v198
    %v335 = vunpack.c.l.b16 %v43
    %v336 = vunpack.c.h.b16 %v43
    %v337 = vunpack.c.l.b16 %v44
    %v338 = vunpack.c.h.b16 %v44
    %v339 = vunpack.c.l.b16 %v45
    %v340 = vunpack.c.h.b16 %v45
    %v341 = vunpack.c.l.b16 %v46
    %v342 = vunpack.c.h.b16 %v46
    %v343 = vunpack.c.l.b16 %v47
    %v344 = vunpack.c.h.b16 %v47
    %v345 = vunpack.c.l.b16 %v48
    %v346 = vunpack.c.h.b16 %v48
    %v347 = vunpack.c.l.b16 %v49
    %v348 = vunpack.c.h.b16 %v49
    %v349 = vunpack.c.l.b16 %v50
    %v350 = vunpack.c.h.b16 %v50
    %v351 = vunpack.c.l.b16 %v51
    %v352 = vunpack.c.h.b16 %v51
    %v353 = vunpack.c.l.b16 %v52
    %v354 = vunpack.c.h.b16 %v52
    %v355 = vunpack.c.l.b16 %v53
    %v356 = vunpack.c.h.b16 %v53
    %v357 = vunpack.c.l.b16 %v54
    %v358 = vunpack.c.h.b16 %v54
    %v359 = vunpack.c.l.b16 %v55
    %v360 = vunpack.c.h.b16 %v55
    %v361 = vunpack.c.l.b16 %v56
    %v362 = vunpack.c.h.b16 %v56
    %v363 = vunpack.c.l.b16 %v57
    %v364 = vunpack.c.h.b16 %v57
    %v365 = vunpack.c.l.b16 %v58
    %v366 = vunpack.c.h.b16 %v58
    %v367 = vunpack.c.l.b16 %v59
    %v368 = vunpack.c.h.b16 %v59
    %v369 = vunpack.c.l.b16 %v60
    %v370 = vunpack.c.h.b16 %v60
    %v371 = vunpack.c.l.b16 %v61
    %v372 = vunpack.c.h.b16 %v61
    %v373 = vunpack.c.l.b16 %v62
    %v374 = vunpack.c.h.b16 %v62
    %v375 = vunpack.c.l.b16 %v63
    %v376 = vunpack.c.h.b16 %v63
    %v377 = vunpack.c.l.b16 %v64
    %v378 = vunpack.c.h.b16 %v64
    %v379 = vunpack.c.l.b16 %v65
    %v380 = vunpack.c.h.b16 %v65
    %v381 = vunpack.c.l.b16 %v66
    %v382 = vunpack.c.h.b16 %v66
    %v383 = vunpack.c.l.b16 %v67
    %v384 = vunpack.c.h.b16 %v67
    %v385 = vunpack.c.l.b16 %v68
    %v386 = vunpack.c.h.b16 %v68
    %v387 = vunpack.c.l.b16 %v69
    %v388 = vunpack.c.h.b16 %v69
    %v389 = vunpack.c.l.b16 %v70
    %v390 = vunpack.c.h.b16 %v70
    %v391 = vunpack.c.l.b16 %v71
    %v392 = vunpack.c.h.b16 %v71
    %v393 = vunpack.c.l.b16 %v72
    %v394 = vunpack.c.h.b16 %v72
    %v395 = vunpack.c.l.b16 %v73
    %v396 = vunpack.c.h.b16 %v73
    %v397 = vunpack.c.l.b16 %v74
    %v398 = vunpack.c.h.b16 %v74
    %v399 = vunpack.c.l.b16 %v75
    %v400 = vunpack.c.h.b16 %v75
    %v401 = vunpack.c.l.b16 %v76
    %v402 = vunpack.c.h.b16 %v76
    %v403 = vunpack.c.l.b16 %v77
    %v404 = vunpack.c.h.b16 %v77
    %v405 = vunpack.c.l.b16 %v78
    %v406 = vunpack.c.h.b16 %v78
    %v407 = vunpack.c.l.b16 %v79
    %v408 = vunpack.c.h.b16 %v79
    %v409 = vunpack.c.l.b16 %v80
    %v410 = vunpack.c.h.b16 %v80
    %v411 = vunpack.c.l.b16 %v81
    %v412 = vunpack.c.h.b16 %v81
    %v413 = vunpack.c.l.b16 %v82
    %v414 = vunpack.c.h.b16 %v82
    %v415 = vunpack.c.l.b16 %v83
    %v416 = vunpack.c.h.b16 %v83
    %v417 = vunpack.c.l.b16 %v84
    %v418 = vunpack.c.h.b16 %v84
    %v419 = vunpack.c.l.b16 %v85
    %v420 = vunpack.c.h.b16 %v85
    %v421 = vunpack.c.l.b16 %v86
    %v422 = vunpack.c.h.b16 %v86
    %v423 = vunpack.c.l.b16 %v87
    %v424 = vunpack.c.h.b16 %v87
    %v425 = vunpack.c.l.b16 %v88
    %v426 = vunpack.c.h.b16 %v88
    %v427 = vunpack.c.l.b16 %v89
    %v428 = vunpack.c.h.b16 %v89
    %v429 = vunpack.c.l.b16 %v90
    %v430 = vunpack.c.h.b16 %v90
    %v431 = vunpack.c.l.b16 %v91
    %v432 = vunpack.c.h.b16 %v91
    %v433 = vunpack.c.l.b16 %v92
    %v434 = vunpack.c.h.b16 %v92
    %v435 = vunpack.c.l.b16 %v93
    %v436 = vunpack.c.h.b16 %v93
    %v437 = vunpack.c.l.b16 %v94
    %v438 = vunpack.c.h.b16 %v94
    %v439 = vunpack.c.l.b16 %v95
    %v440 = vunpack.c.h.b16 %v95
    %v441 = vunpack.c.l.b16 %v96
    %v442 = vunpack.c.h.b16 %v96
    %v443 = vunpack.c.l.b16 %v97
    %v444 = vunpack.c.h.b16 %v97
    %v445 = vunpack.c.l.b16 %v98
    %v446 = vunpack.c.h.b16 %v98
    %v447 = vunpack.c.l.b16 %v99
    %v448 = vunpack.c.h.b16 %v99
    %v449 = vunpack.c.l.b16 %v100
    %v450 = vunpack.c.h.b16 %v100
    %v451 = vunpack.c.l.b16 %v101
    %v452 = vunpack.c.h.b16 %v101
    %v453 = vunpack.c.l.b16 %v102
    %v454 = vunpack.c.h.b16 %v102
    %v455 = vunpack.c.l.b16 %v103
    %v456 = vunpack.c.h.b16 %v103
    %v457 = vunpack.c.l.b16 %v104
    %v458 = vunpack.c.h.b16 %v104
    %v459 = vunpack.c.l.b16 %v105
    %v460 = vunpack.c.h.b16 %v105
    %v461 = vunpack.c.l.b16 %v106
    %v462 = vunpack.c.h.b16 %v106
    %v463 = vunpack.c.l.b16 %v107
    %v464 = vunpack.c.h.b16 %v107
    %v465 = vunpack.c.l.b16 %v108
    %v466 = vunpack.c.h.b16 %v108
    %v467 = vunpack.c.l.b16 %v109
    %v468 = vunpack.c.h.b16 %v109
    %v469 = vunpack.c.l.b16 %v110
    %v470 = vunpack.c.h.b16 %v110
    %v471 = vunpack.c.l.b16 %v111
    %v472 = vunpack.c.h.b16 %v111
    %v473 = vunpack.c.l.b16 %v112
    %v474 = vunpack.c.h.b16 %v112
    %v475 = vunpack.c.l.b16 %v113
    %v476 = vunpack.c.h.b16 %v113
    %v477 = vunpack.c.l.b16 %v114
    %v478 = vunpack.c.h.b16 %v114
    %v479 = vunpack.c.l.b16 %v115
    %v480 = vunpack.c.h.b16 %v115
    %v481 = vunpack.c.l.b16 %v116
    %v482 = vunpack.c.h.b16 %v116
    %v483 = vunpack.c.l.b16 %v117
    %v484 = vunpack.c.h.b16 %v117
    %v485 = vunpack.c.l.b16 %v118
    %v486 = vunpack.c.h.b16 %v118
    %v487 = vunpack.c.l.b16 %v119
    %v488 = vunpack.c.h.b16 %v119
    %v489 = vunpack.c.l.b16 %v120
    %v490 = vunpack.c.h.b16 %v120
    %v491 = vunpack.c.l.b16 %v121
    %v492 = vunpack.c.h.b16 %v121
    %v493 = vunpack.c.l.b16 %v122
    %v494 = vunpack.c.h.b16 %v122
    %v495 = vunpack.c.l.b16 %v123
    %v496 = vunpack.c.h.b16 %v123
    %v497 = vunpack.c.l.b16 %v124
    %v498 = vunpack.c.h.b16 %v124
    %v499 = vunpack.c.l.b16 %v125
    %v500 = vunpack.c.h.b16 %v125
    %v501 = vunpack.c.l.b16 %v126
    %v502 = vunpack.c.h.b16 %v126
    %v503 = vunpack.c.l.b16 %v127
    %v504 = vunpack.c.h.b16 %v127
    %v505 = vunpack.c.l.b16 %v128
    %v506 = vunpack.c.h.b16 %v128
    %v507 = vunpack.c.l.b16 %v129
    %v508 = vunpack.c.h.b16 %v129
    %v509 = vunpack.c.l.b16 %v130
    %v510 = vunpack.c.h.b16 %v130
    %v511 = vunpack.c.l.b16 %v131
    %v512 = vunpack.c.h.b16 %v131
    %v513 = vunpack.c.l.b16 %v132
    %v514 = vunpack.c.h.b16 %v132
    %v515 = vunpack.c.l.b16 %v133
    %v516 = vunpack.c.h.b16 %v133
    %v517 = vunpack.c.l.b16 %v134
    %v518 = vunpack.c.h.b16 %v134
    %v519 = vunpack.c.l.b16 %v135
    %v520 = vunpack.c.h.b16 %v135
    %v521 = vunpack.c.l.b16 %v136
    %v522 = vunpack.c.h.b16 %v136
    %v523 = vunpack.c.l.b16 %v137
    %v524 = vunpack.c.h.b16 %v137
    %v525 = vunpack.c.l.b16 %v138
    %v526 = vunpack.c.h.b16 %v138
    %v527 = vunpack.c.l.b16 %v139
    %v528 = vunpack.c.h.b16 %v139
    %v529 = vunpack.c.l.b16 %v140
    %v530 = vunpack.c.h.b16 %v140
    %v531 = vunpack.c.l.b16 %v141
    %v532 = vunpack.c.h.b16 %v141
    %v533 = vunpack.c.l.b16 %v142
    %v534 = vunpack.c.h.b16 %v142
    %v535 = vunpack.c.l.b16 %v143
    %v536 = vunpack.c.h.b16 %v143
    %v537 = vunpack.c.l.b16 %v144
    %v538 = vunpack.c.h.b16 %v144
    %v539 = vunpack.c.l.b16 %v145
    %v540 = vunpack.c.h.b16 %v145
    %v541 = vunpack.c.l.b16 %v146
    %v542 = vunpack.c.h.b16 %v146
    %v543 = vunpack.c.l.b16 %v147
    %v544 = vunpack.c.h.b16 %v147
    %v545 = vunpack.c.l.b16 %v148
    %v546 = vunpack.c.h.b16 %v148
    %v547 = vunpack.c.l.b16 %v149
    %v548 = vunpack.c.h.b16 %v149
    %v549 = vunpack.c.l.b16 %v150
    %v550 = vunpack.c.h.b16 %v150
    %v551 = vunpack.c.l.b16 %v151
    %v552 = vunpack.c.h.b16 %v151
    %v553 = vunpack.c.l.b16 %v152
    %v554 = vunpack.c.h.b16 %v152
    %v555 = vunpack.c.l.b16 %v153
    %v556 = vunpack.c.h.b16 %v153
    %v557 = vunpack.c.l.b16 %v154
    %v558 = vunpack.c.h.b16 %v154
    %v559 = vunpack.c.l.b16 %v155
    %v560 = vunpack.c.h.b16 %v155
    %v561 = vunpack.c.l.b16 %v156
    %v562 = vunpack.c.h.b16 %v156
    %v563 = vunpack.c.l.b16 %v157
    %v564 = vunpack.c.h.b16 %v157
    %v565 = vunpack.c.l.b16 %v158
    %v566 = vunpack.c.h.b16 %v158
    %v567 = vunpack.c.l.b16 %v159
    %v568 = vunpack.c.h.b16 %v159
    %v569 = vunpack.c.l.b16 %v160
    %v570 = vunpack.c.h.b16 %v160
    %v571 = vunpack.c.l.b16 %v161
    %v572 = vunpack.c.h.b16 %v161
    %v573 = vunpack.c.l.b16 %v162
    %v574 = vunpack.c.h.b16 %v162
    %v575 = vunpack.c.l.b16 %v163
    %v576 = vunpack.c.h.b16 %v163
    %v577 = vunpack.c.l.b16 %v164
    %v578 = vunpack.c.h.b16 %v164
    %v579 = vunpack.c.l.b16 %v165
    %v580 = vunpack.c.h.b16 %v165
    %v581 = vunpack.c.l.b16 %v166
    %v582 = vunpack.c.h.b16 %v166
    %v583 = vunpack.c.l.b16 %v167
    %v584 = vunpack.c.h.b16 %v167
    %v585 = vunpack.c.l.b16 %v168
    %v586 = vunpack.c.h.b16 %v168
    %v587 = vunpack.c.l.b16 %v169
    %v588 = vunpack.c.h.b16 %v169
    %v589 = vunpack.c.l.b16 %v170
    %v590 = vunpack.c.h.b16 %v170
    %v591 = vpack.c.b16 %v339, %v335
    %v592 = vpack.c.b16 %v340, %v336
    %v593 = vpack.c.b16 %v341, %v337
    %v594 = vpack.c.b16 %v342, %v338
    %v595 = vpack.c.b16 %v347, %v343
    %v596 = vpack.c.b16 %v348, %v344
    %v597 = vpack.c.b16 %v349, %v345
    %v598 = vpack.c.b16 %v350, %v346
    %v599 = vpack.c.b16 %v355, %v351
    %v600 = vpack.c.b16 %v356, %v352
    %v601 = vpack.c.b16 %v357, %v353
    %v602 = vpack.c.b16 %v358, %v354
    %v603 = vpack.c.b16 %v363, %v359
    %v604 = vpack.c.b16 %v364, %v360
    %v605 = vpack.c.b16 %v365, %v361
    %v606 = vpack.c.b16 %v366, %v362
    %v607 = vpack.c.b16 %v371, %v367
    %v608 = vpack.c.b16 %v372, %v368
    %v609 = vpack.c.b16 %v373, %v369
    %v610 = vpack.c.b16 %v374, %v370
    %v611 = vpack.c.b16 %v379, %v375
    %v612 = vpack.c.b16 %v380, %v376
    %v613 = vpack.c.b16 %v381, %v377
    %v614 = vpack.c.b16 %v382, %v378
    %v615 = vpack.c.b16 %v387, %v383
    %v616 = vpack.c.b16 %v388, %v384
    %v617 = vpack.c.b16 %v389, %v385
    %v618 = vpack.c.b16 %v390, %v386
    %v619 = vpack.c.b16 %v395, %v391
    %v620 = vpack.c.b16 %v396, %v392
    %v621 = vpack.c.b16 %v397, %v393
    %v622 = vpack.c.b16 %v398, %v394
    %v623 = vpack.c.b16 %v403, %v399
    %v624 = vpack.c.b16 %v404, %v400
    %v625 = vpack.c.b16 %v405, %v401
    %v626 = vpack.c.b16 %v406, %v402
    %v627 = vpack.c.b16 %v411, %v407
    %v628 = vpack.c.b16 %v412, %v408
    %v629 = vpack.c.b16 %v413, %v409
    %v630 = vpack.c.b16 %v414, %v410
    %v631 = vpack.c.b16 %v419, %v415
    %v632 = vpack.c.b16 %v420, %v416
    %v633 = vpack.c.b16 %v421, %v417
    %v634 = vpack.c.b16 %v422, %v418
    %v635 = vpack.c.b16 %v427, %v423
    %v636 = vpack.c.b16 %v428, %v424
    %v637 = vpack.c.b16 %v429, %v425
    %v638 = vpack.c.b16 %v430, %v426
    %v639 = vpack.c.b16 %v435, %v431
    %v640 = vpack.c.b16 %v436, %v432
    %v641 = vpack.c.b16 %v437, %v433
    %v642 = vpack.c.b16 %v438, %v434
    %v643 = vpack.c.b16 %v443, %v439
    %v644 = vpack.c.b16 %v444, %v440
    %v645 = vpack.c.b16 %v445, %v441
    %v646 = vpack.c.b16 %v446, %v442
    %v647 = vpack.c.b16 %v451, %v447
    %v648 = vpack.c.b16 %v452, %v448
    %v649 = vpack.c.b16 %v453, %v449
    %v650 = vpack.c.b16 %v454, %v450
    %v651 = vpack.c.b16 %v459, %v455
    %v652 = vpack.c.b16 %v460, %v456
    %v653 = vpack.c.b16 %v461, %v457
    %v654 = vpack.c.b16 %v462, %v458
    %v655 = vpack.c.b16 %v467, %v463
    %v656 = vpack.c.b16 %v468, %v464
    %v657 = vpack.c.b16 %v469, %v465
    %v658 = vpack.c.b16 %v470, %v466
    %v659 = vpack.c.b16 %v475, %v471
    %v660 = vpack.c.b16 %v476, %v472
    %v661 = vpack.c.b16 %v477, %v473
    %v662 = vpack.c.b16 %v478, %v474
    %v663 = vpack.c.b16 %v483, %v479
    %v664 = vpack.c.b16 %v484, %v480
    %v665 = vpack.c.b16 %v485, %v481
    %v666 = vpack.c.b16 %v486, %v482
    %v667 = vpack.c.b16 %v491, %v487
    %v668 = vpack.c.b16 %v492, %v488
    %v669 = vpack.c.b16 %v493, %v489
    %v670 = vpack.c.b16 %v494, %v490
    %v671 = vpack.c.b16 %v499, %v495
    %v672 = vpack.c.b16 %v500, %v496
    %v673 = vpack.c.b16 %v501, %v497
    %v674 = vpack.c.b16 %v502, %v498
    %v675 = vpack.c.b16 %v507, %v503
    %v676 = vpack.c.b16 %v508, %v504
    %v677 = vpack.c.b16 %v509, %v505
    %v678 = vpack.c.b16 %v510, %v506
    %v679 = vpack.c.b16 %v515, %v511
    %v680 = vpack.c.b16 %v516, %v512
    %v681 = vpack.c.b16 %v517, %v513
    %v682 = vpack.c.b16 %v518, %v514
    %v683 = vpack.c.b16 %v523, %v519
    %v684 = vpack.c.b16 %v524, %v520
    %v685 = vpack.c.b16 %v525, %v521
    %v686 = vpack.c.b16 %v526, %v522
    %v687 = vpack.c.b16 %v531, %v527
    %v688 = vpack.c.b16 %v532, %v528
    %v689 = vpack.c.b16 %v533, %v529
    %v690 = vpack.c.b16 %v534, %v530
    %v691 = vpack.c.b16 %v539, %v535
    %v692 = vpack.c.b16 %v540, %v536
    %v693 = vpack.c.b16 %v541, %v537
    %v694 = vpack.c.b16 %v542, %v538
    %v695 = vpack.c.b16 %v547, %v543
    %v696 = vpack.c.b16 %v548, %v544
    %v697 = vpack.c.b16 %v549, %v545
    %v698 = vpack.c.b16 %v550, %v546
    %v699 = vpack.c.b16 %v555, %v551
    %v700 = vpack.c.b16 %v556, %v552
    %v701 = vpack.c.b16 %v557, %v553
    %v702 = vpack.c.b16 %v558, %v554
    %v703 = vpack.c.b16 %v563, %v559
    %v704 = vpack.c.b16 %v564, %v560
    %v705 = vpack.c.b16 %v565, %v561
    %v706 = vpack.c.b16 %v566, %v562
    %v707 = vpack.c.b16 %v571, %v567
    %v708 = vpack.c.b16 %v572, %v568
    %v709 = vpack.c.b16 %v573, %v569
    %v710 = vpack.c.b16 %v574, %v570
    %v711 = vpack.c.b16 %v579, %v575
    %v712 = vpack.c.b16 %v580, %v576
    %v713 = vpack.c.b16 %v581, %v577
    %v714 = vpack.c.b16 %v582, %v578
    %v715 = vpack.c.b16 %v587, %v583
    %v716 = vpack.c.b16 %v588, %v584
    %v717 = vpack.c.b16 %v589, %v585
    %v718 = vpack.c.b16 %v590, %v586
    %847 = vmatprep.subr.bf16.mxu0 %v592
    %848 = vmatpush1.bf16.msra.mxu0 %v591
    %849 = vmatprep.subr.bf16.mxu0 %v596
    %850 = vmatpush1.bf16.msra.mxu0 %v595
    %851 = vmatprep.subr.bf16.mxu0 %v600
    %852 = vmatpush1.bf16.msra.mxu0 %v599
    %853 = vmatprep.subr.bf16.mxu0 %v604
    %854 = vmatpush1.bf16.msra.mxu0 %v603
    %855 = vmatprep.subr.bf16.mxu0 %v608
    %856 = vmatpush1.bf16.msra.mxu0 %v607
    %857 = vmatprep.subr.bf16.mxu0 %v612
    %858 = vmatpush1.bf16.msra.mxu0 %v611
    %859 = vmatprep.subr.bf16.mxu0 %v616
    %860 = vmatpush1.bf16.msra.mxu0 %v615
    %861 = vmatprep.subr.bf16.mxu0 %v620
    %862 = vmatpush1.bf16.msra.mxu0 %v619
    %863 = vmatprep.subr.bf16.mxu0 %v624
    %864 = vmatpush1.bf16.msra.mxu0 %v623
    %865 = vmatprep.subr.bf16.mxu0 %v628
    %866 = vmatpush1.bf16.msra.mxu0 %v627
    %867 = vmatprep.subr.bf16.mxu0 %v632
    %868 = vmatpush1.bf16.msra.mxu0 %v631
    %869 = vmatprep.subr.bf16.mxu0 %v636
    %870 = vmatpush1.bf16.msra.mxu0 %v635
    %871 = vmatprep.subr.bf16.mxu0 %v640
    %872 = vmatpush1.bf16.msra.mxu0 %v639
    %873 = vmatprep.subr.bf16.mxu0 %v644
    %874 = vmatpush1.bf16.msra.mxu0 %v643
    %875 = vmatprep.subr.bf16.mxu0 %v648
    %876 = vmatpush1.bf16.msra.mxu0 %v647
    %877 = vmatprep.subr.bf16.mxu0 %v652
    %878 = vmatpush1.bf16.msra.mxu0 %v651
    %879 = vmatprep.mubr.bf16.mxu0 %v200
    %880 = vmatmul.mubr.bf16.gmra.mrb[0].mxu0 %v199
    %v881 = vpop.f32.mrb[0].mxu0
    %v882 = vadd.f32 %v176, %v881
    %v883 = vpop.f32.mrb[0].mxu0
    %v884 = vadd.f32 %v180, %v883
    %v885 = vpop.f32.mrb[0].mxu0
    %v886 = vpop.f32.mrb[0].mxu0
    %887 = vdwg.mxu0
    %888 = vmatprep.subr.bf16.mxu0 %v656
    %889 = vmatpush1.bf16.msra.mxu0 %v655
    %890 = vmatprep.subr.bf16.mxu0 %v660
    %891 = vmatpush1.bf16.msra.mxu0 %v659
    %892 = vmatprep.subr.bf16.mxu0 %v664
    %893 = vmatpush1.bf16.msra.mxu0 %v663
    %894 = vmatprep.subr.bf16.mxu0 %v668
    %895 = vmatpush1.bf16.msra.mxu0 %v667
    %896 = vmatprep.subr.bf16.mxu0 %v672
    %897 = vmatpush1.bf16.msra.mxu0 %v671
    %898 = vmatprep.subr.bf16.mxu0 %v676
    %899 = vmatpush1.bf16.msra.mxu0 %v675
    %900 = vmatprep.subr.bf16.mxu0 %v680
    %901 = vmatpush1.bf16.msra.mxu0 %v679
    %902 = vmatprep.subr.bf16.mxu0 %v684
    %903 = vmatpush1.bf16.msra.mxu0 %v683
    %904 = vmatprep.subr.bf16.mxu0 %v688
    %905 = vmatpush1.bf16.msra.mxu0 %v687
    %906 = vmatprep.subr.bf16.mxu0 %v692
    %907 = vmatpush1.bf16.msra.mxu0 %v691
    %908 = vmatprep.subr.bf16.mxu0 %v696
    %909 = vmatpush1.bf16.msra.mxu0 %v695
    %910 = vmatprep.subr.bf16.mxu0 %v700
    %911 = vmatpush1.bf16.msra.mxu0 %v699
    %912 = vmatprep.subr.bf16.mxu0 %v704
    %913 = vmatpush1.bf16.msra.mxu0 %v703
    %914 = vmatprep.subr.bf16.mxu0 %v708
    %915 = vmatpush1.bf16.msra.mxu0 %v707
    %916 = vmatprep.subr.bf16.mxu0 %v712
    %917 = vmatpush1.bf16.msra.mxu0 %v711
    %918 = vmatprep.subr.bf16.mxu0 %v716
    %919 = vmatpush1.bf16.msra.mxu0 %v715
    %920 = vmatprep.mubr.bf16.mxu0 %v202
    %921 = vmatmul.mubr.bf16.gmra.mrb[0].mxu0 %v201
    %v922 = vpop.f32.mrb[0].mxu0
    %v923 = vadd.f32 %v882, %v922
    %v924 = vpop.f32.mrb[0].mxu0
    %v925 = vadd.f32 %v884, %v924
    %v926 = vpop.f32.mrb[0].mxu0
    %v927 = vpop.f32.mrb[0].mxu0
    %928 = vdwg.mxu0
    %929 = vmatprep.subr.bf16.mxu0 %v594
    %930 = vmatpush1.bf16.msra.mxu0 %v593
    %931 = vmatprep.subr.bf16.mxu0 %v598
    %932 = vmatpush1.bf16.msra.mxu0 %v597
    %933 = vmatprep.subr.bf16.mxu0 %v602
    %934 = vmatpush1.bf16.msra.mxu0 %v601
    %935 = vmatprep.subr.bf16.mxu0 %v606
    %936 = vmatpush1.bf16.msra.mxu0 %v605
    %937 = vmatprep.subr.bf16.mxu0 %v610
    %938 = vmatpush1.bf16.msra.mxu0 %v609
    %939 = vmatprep.subr.bf16.mxu0 %v614
    %940 = vmatpush1.bf16.msra.mxu0 %v613
    %941 = vmatprep.subr.bf16.mxu0 %v618
    %942 = vmatpush1.bf16.msra.mxu0 %v617
    %943 = vmatprep.subr.bf16.mxu0 %v622
    %944 = vmatpush1.bf16.msra.mxu0 %v621
    %945 = vmatprep.subr.bf16.mxu0 %v626
    %946 = vmatpush1.bf16.msra.mxu0 %v625
    %947 = vmatprep.subr.bf16.mxu0 %v630
    %948 = vmatpush1.bf16.msra.mxu0 %v629
    %949 = vmatprep.subr.bf16.mxu0 %v634
    %950 = vmatpush1.bf16.msra.mxu0 %v633
    %951 = vmatprep.subr.bf16.mxu0 %v638
    %952 = vmatpush1.bf16.msra.mxu0 %v637
    %953 = vmatprep.subr.bf16.mxu0 %v642
    %954 = vmatpush1.bf16.msra.mxu0 %v641
    %955 = vmatprep.subr.bf16.mxu0 %v646
    %956 = vmatpush1.bf16.msra.mxu0 %v645
    %957 = vmatprep.subr.bf16.mxu0 %v650
    %958 = vmatpush1.bf16.msra.mxu0 %v649
    %959 = vmatprep.subr.bf16.mxu0 %v654
    %960 = vmatpush1.bf16.msra.mxu0 %v653
    %961 = vmatprep.mubr.bf16.mxu0 %v200
    %962 = vmatmul.mubr.bf16.gmra.mrb[0].mxu0 %v199
    %v963 = vpop.f32.mrb[0].mxu0
    %v964 = vadd.f32 %v184, %v963
    %v965 = vpop.f32.mrb[0].mxu0
    %v966 = vadd.f32 %v188, %v965
    %v967 = vpop.f32.mrb[0].mxu0
    %v968 = vpop.f32.mrb[0].mxu0
    %969 = vdwg.mxu0
    %970 = vmatprep.subr.bf16.mxu0 %v658
    %971 = vmatpush1.bf16.msra.mxu0 %v657
    %972 = vmatprep.subr.bf16.mxu0 %v662
    %973 = vmatpush1.bf16.msra.mxu0 %v661
    %974 = vmatprep.subr.bf16.mxu0 %v666
    %975 = vmatpush1.bf16.msra.mxu0 %v665
    %976 = vmatprep.subr.bf16.mxu0 %v670
    %977 = vmatpush1.bf16.msra.mxu0 %v669
    %978 = vmatprep.subr.bf16.mxu0 %v674
    %979 = vmatpush1.bf16.msra.mxu0 %v673
    %980 = vmatprep.subr.bf16.mxu0 %v678
    %981 = vmatpush1.bf16.msra.mxu0 %v677
    %982 = vmatprep.subr.bf16.mxu0 %v682
    %983 = vmatpush1.bf16.msra.mxu0 %v681
    %984 = vmatprep.subr.bf16.mxu0 %v686
    %985 = vmatpush1.bf16.msra.mxu0 %v685
    %986 = vmatprep.subr.bf16.mxu0 %v690
    %987 = vmatpush1.bf16.msra.mxu0 %v689
    %988 = vmatprep.subr.bf16.mxu0 %v694
    %989 = vmatpush1.bf16.msra.mxu0 %v693
    %990 = vmatprep.subr.bf16.mxu0 %v698
    %991 = vmatpush1.bf16.msra.mxu0 %v697
    %992 = vmatprep.subr.bf16.mxu0 %v702
    %993 = vmatpush1.bf16.msra.mxu0 %v701
    %994 = vmatprep.subr.bf16.mxu0 %v706
    %995 = vmatpush1.bf16.msra.mxu0 %v705
    %996 = vmatprep.subr.bf16.mxu0 %v710
    %997 = vmatpush1.bf16.msra.mxu0 %v709
    %998 = vmatprep.subr.bf16.mxu0 %v714
    %999 = vmatpush1.bf16.msra.mxu0 %v713
    %1000 = vmatprep.subr.bf16.mxu0 %v718
    %1001 = vmatpush1.bf16.msra.mxu0 %v717
    %1002 = vmatprep.mubr.bf16.mxu0 %v202
    %1003 = vmatmul.mubr.bf16.gmra.mrb[0].mxu0 %v201
    %v1004 = vpop.f32.mrb[0].mxu0
    %v1005 = vadd.f32 %v964, %v1004
    %v1006 = vpop.f32.mrb[0].mxu0
    %v1007 = vadd.f32 %v966, %v1006
    %v1008 = vpop.f32.mrb[0].mxu0
    %v1009 = vpop.f32.mrb[0].mxu0
    %1010 = vdwg.mxu0
    %v1011 = vmax.f32 %v923, 0.0
    %v1012 = vmax.f32 %v925, 0.0
    %v1013 = vmax.f32 %v1005, 0.0
    %v1014 = vmax.f32 %v1007, 0.0
    %v1015 = vunpack.c.l.bf16 %v41
    %v1016 = vunpack.c.h.bf16 %v41
    %v1017 = vunpack.c.l.bf16 %v42
    %v1018 = vunpack.c.h.bf16 %v42
    %v1019 = vadd.f32 %v1011, %v1015
    %v1020 = vadd.f32 %v1012, %v1016
    %v1021 = vadd.f32 %v1013, %v1017
    %v1022 = vadd.f32 %v1014, %v1018
    %1023 = vst [vmem:[#allocation7] sm:$0xff] %v1019
    %1024 = vst [vmem:[#allocation7 + $0x8] sm:$0xff] %v1020
    %1025 = vst [vmem:[#allocation7 + $0x10] sm:$0xff] %v1021
    %1026 = vst [vmem:[#allocation7 + $0x18] sm:$0xff] %v1022
    // Predicated region
    $region22: #{tpu_custom_call.1} parent=1 // pred_check
      _
    $region23: #{tpu_custom_call.1} parent=1 // pred_check_branch
      %1028 = sbr.rel (0) target = $region25
    $region24: #{tpu_custom_call.1} parent=1 // pred_region
      %s1030 = ssub.s32 512, 512
      %1031 = vsyncadd [#allocation4], %s1030
      %s1033 = sshll.u32 [#allocation7], 4
      %s1034 = int_to_ptr.vmem [resolvable:$true] %s1033
      %1036 = dma.vmem_to_hbm [thread:$0]  %s1034, 512, %s3, [#allocation4]
    $region25: #{tpu_custom_call.1} parent=1 // pred_fallthru
      _
    // Predicated region
    $region26: #{tpu_custom_call.1} parent=1 // pred_check
      _
    $region27: #{tpu_custom_call.1} parent=1 // pred_check_branch
      %1038 = sbr.rel (0) target = $region29
    $region28: #{tpu_custom_call.1} parent=1 // pred_region
      %1039 = dma.done [#allocation4], 512
    $region29: #{tpu_custom_call.1} parent=1 // pred_fallthru
      _
    %1040 = vsyncpa [#allocation3], 1
    %1041 = vsyncpa [#allocation6], 1
    %1042 = vsyncpa [#allocation4], 1

</llo_original>
